<compile_context>
chip_gen: v7x
topology: tpu7x:2x2x1
jax: 0.10.0
libtpu: 0.0.40
codegen_flags: <defaults>
</compile_context>

<pallas_src>
import functools

import jax
import jax.numpy as jnp
from jax.experimental import pallas as pl
from jax.experimental.pallas import tpu as pltpu


_LN_EPS = 1e-5
_NEG_INF = float("-inf")


def _erf(x):
    # Abramowitz & Stegun 7.1.26 rational approximation, |abs error| <= 1.5e-7.
    a1 = 0.254829592
    a2 = -0.284496736
    a3 = 1.421413741
    a4 = -1.453152027
    a5 = 1.061405429
    p = 0.3275911
    ax = jnp.abs(x)
    t = 1.0 / (1.0 + p * ax)
    poly = ((((a5 * t + a4) * t + a3) * t + a2) * t + a1) * t
    y = 1.0 - poly * jnp.exp(-(ax * ax))
    return jnp.where(x < 0.0, -y, y)


def _gelu_exact(x):
    # Exact (erf-based) GELU == torch.nn.GELU() default.
    return 0.5 * x * (1.0 + _erf(x * 0.7071067811865476))


def _attention_pooling_kernel(x_ref, m_ref, w1_ref, b1_ref, ln_g_ref, ln_b_ref,
                              w2_ref, b2_ref, o_ref, m_sc, l_sc, acc_sc,
                              *, mxu_precision):
    # x_ref : (tS, H)  hidden-state tile of one batch row (batch dim squeezed)
    # m_ref : (tS, 1)  integer attention mask tile for the same row
    # w1_ref: (H, H)   first Linear weight (x @ w1), VMEM-resident, native dtype
    # b1_ref, ln_g_ref, ln_b_ref: (1, H) f32;  w2_ref: (H, 1) f32
    # b2_ref: (1,) f32 scalar in SMEM
    # o_ref : (1, H)   pooled output for this batch row (written on last tile)
    # m_sc, l_sc: (1, 1) f32 running max / denom;  acc_sc: (1, H) f32 accum
    s_idx = pl.program_id(1)

    @pl.when(s_idx == 0)
    def _():
        m_sc[...] = jnp.full_like(m_sc, _NEG_INF)
        l_sc[...] = jnp.zeros_like(l_sc)
        acc_sc[...] = jnp.zeros_like(acc_sc)

    x = x_ref[...]                                        # (tS, H), native dtype

    # ---- Linear(H -> H): the dominant MXU matmul, native-dtype operands ----
    a = jnp.dot(x, w1_ref[...], preferred_element_type=jnp.float32,
                precision=mxu_precision)                  # (tS, H) f32
    a = a + b1_ref[...]

    # ---- LayerNorm over the hidden dim (biased variance, eps=1e-5) ----
    mu = jnp.mean(a, axis=-1, keepdims=True)
    d = a - mu
    var = jnp.mean(d * d, axis=-1, keepdims=True)
    a = d * jax.lax.rsqrt(var + _LN_EPS)
    a = a * ln_g_ref[...] + ln_b_ref[...]

    # ---- GELU (exact / erf form) ----
    a = _gelu_exact(a)

    # ---- Linear(H -> 1) on the MXU ----
    scores = jnp.dot(a, w2_ref[...], preferred_element_type=jnp.float32,
                     precision=jax.lax.Precision.HIGHEST)  # (tS, 1)
    scores = scores + b2_ref[0]

    # ---- mask with -inf (as in the PyTorch module) + online softmax ----
    scores = jnp.where(m_ref[...] == 0, _NEG_INF, scores)

    m_prev = m_sc[...]                                     # (1, 1)
    m_new = jnp.maximum(m_prev, jnp.max(scores, axis=0, keepdims=True))
    # Subtraction base: avoids (-inf) - (-inf) NaNs when every score seen so
    # far is masked; fully masked rows still end with l == 0 -> NaN output,
    # matching torch.softmax of an all -inf row.
    m_safe = jnp.maximum(m_new, -1e30)
    alpha = jnp.exp(m_prev - m_safe)                       # (1, 1)
    e = jnp.exp(scores - m_safe)                           # (tS, 1)

    l_sc[...] = alpha * l_sc[...] + jnp.sum(e, axis=0, keepdims=True)

    # e^T @ x on the MXU (contract over the sequence-tile axis); softmax
    # normalization is applied once on the (1, H) result at finalize time.
    wx = jax.lax.dot_general(e.astype(x.dtype), x,
                             (((0,), (0,)), ((), ())),
                             preferred_element_type=jnp.float32,
                             precision=jax.lax.Precision.HIGHEST)  # (1, H)
    acc_sc[...] = alpha * acc_sc[...] + wx
    m_sc[...] = m_new

    @pl.when(s_idx == pl.num_programs(1) - 1)
    def _():
        o_ref[...] = (acc_sc[...] * (1.0 / l_sc[...])).astype(o_ref.dtype)


def _vmem_budget_bytes():
    """~80% of this generation's physical VMEM (64 MiB fallback == v7x)."""
    cap = None
    try:
        info = pltpu.get_tpu_info()
        for name in ("vmem_capacity_bytes", "vmem_size_bytes", "vmem_bytes"):
            cap = getattr(info, name, None)
            if cap:
                break
    except Exception:
        cap = None
    if not cap:
        cap = 64 * 1024 * 1024
    return int(0.8 * cap)


def _est_block_bytes(t_s, h, x_itemsize):
    """Rough per-step VMEM footprint for sequence tile t_s."""
    sub = max(t_s, 8)
    streamed = 2 * sub * h * x_itemsize            # x tile, double-buffered
    streamed += 2 * sub * 128 * 4                  # int32 mask tile, lane-padded
    resident = h * h * x_itemsize                  # w1 (resident)
    resident += 8 * max(h, 128) * 4 * 4            # small param rows (padded)
    interm = 4 * sub * h * 4                       # f32 LN/GELU intermediates
    out = 2 * 8 * max(h, 128) * 4                  # (1, H) output block
    return streamed + resident + interm + out + (1 << 20)


def attention_pooling(last_hidden_state, attention_mask,
                      w1, b1, ln_gamma, ln_beta, w2, b2):
    """Forward pass of AttentionPooling.

    last_hidden_state: [B, S, H] float array (f32 or bf16)
    attention_mask:    [B, S]    integer mask (0 = padded)
    w1: [H, H] first Linear weight, applied as x @ w1  (== torch weight.T)
    b1, ln_gamma, ln_beta: [H];  w2: [H] (row of torch Linear(H,1).weight); b2: scalar
    returns: [B, H] float32 (PyTorch outputs f32 due to the .float() cast)
    """
    B, S, H = last_hidden_state.shape
    x = last_hidden_state

    # Match w1's dtype to x so the MXU sees native-dtype operands (bf16 stays
    # bf16, no f32 copy); for f32 inputs the kernel uses precision=HIGHEST.
    w1m = jnp.asarray(w1).astype(x.dtype)
    mxu_precision = (jax.lax.Precision.HIGHEST
                     if x.dtype == jnp.float32 else None)

    # Integer mask kept integer (exact ==0 compare, no f32 HBM pass), column
    # oriented to line up with the per-token score column.
    mask3 = jnp.asarray(attention_mask, dtype=jnp.int32).reshape(B, S, 1)

    b1r = jnp.asarray(b1, jnp.float32).reshape(1, H)
    gr = jnp.asarray(ln_gamma, jnp.float32).reshape(1, H)
    br = jnp.asarray(ln_beta, jnp.float32).reshape(1, H)
    w2c = jnp.asarray(w2, jnp.float32).reshape(H, 1)
    b2s = jnp.asarray(b2, jnp.float32).reshape(1)

    # ---- generation-aware VMEM budget + S-tile selection ----
    budget = _vmem_budget_bytes()
    xb = x.dtype.itemsize
    candidates = [S] + [t for t in (4096, 2048, 1024, 512, 256, 128, 64, 32, 16, 8)
                        if t < S and S % t == 0]
    t_s = None
    for t in candidates:
        if _est_block_bytes(t, H, xb) <= budget:
            t_s = t
            break
    if t_s is None:
        # TODO(synk): also tile H for extreme hidden sizes; fall back to the
        # smallest legal S tile and clamp the limit to the physical budget.
        t_s = candidates[-1]
    n_s = S // t_s

    est = _est_block_bytes(t_s, H, xb)
    vmem_limit = int(min(max(est, 16 * 1024 * 1024), budget))

    kernel = functools.partial(_attention_pooling_kernel,
                               mxu_precision=mxu_precision)

    out = pl.pallas_call(
        kernel,
        out_shape=jax.ShapeDtypeStruct((B, 1, H), jnp.float32),
        grid_spec=pltpu.PrefetchScalarGridSpec(
            num_scalar_prefetch=0,
            grid=(B, n_s),
            in_specs=[
                pl.BlockSpec((None, t_s, H), lambda b, s: (b, s, 0)),  # x tile
                pl.BlockSpec((None, t_s, 1), lambda b, s: (b, s, 0)),  # mask tile
                pl.BlockSpec((H, H), lambda b, s: (0, 0)),             # w1 (resident)
                pl.BlockSpec((1, H), lambda b, s: (0, 0)),             # b1
                pl.BlockSpec((1, H), lambda b, s: (0, 0)),             # ln gamma
                pl.BlockSpec((1, H), lambda b, s: (0, 0)),             # ln beta
                pl.BlockSpec((H, 1), lambda b, s: (0, 0)),             # w2 column
                pl.BlockSpec(memory_space=pltpu.MemorySpace.SMEM),     # b2 scalar
            ],
            out_specs=pl.BlockSpec((None, 1, H), lambda b, s: (b, 0, 0)),
            scratch_shapes=[
                pltpu.VMEM((1, 1), jnp.float32),   # running max m
                pltpu.VMEM((1, 1), jnp.float32),   # running denom l
                pltpu.VMEM((1, H), jnp.float32),   # weighted-sum accumulator
            ],
        ),
        compiler_params=pltpu.CompilerParams(
            dimension_semantics=("parallel", "arbitrary"),
            vmem_limit_bytes=vmem_limit,
        ),
    )(x, mask3, w1m, b1r, gr, br, w2c, b2s)

    return out.reshape(B, H)


def _reference(x, mask, w1, b1, gamma, beta, w2, b2):
    """Pure-JAX reference mirroring the PyTorch module (HIGHEST precision)."""
    hp = jax.lax.Precision.HIGHEST
    a = jnp.einsum("bsh,hk->bsk", x, w1, precision=hp) + b1
    mu = jnp.mean(a, axis=-1, keepdims=True)
    var = jnp.mean(jnp.square(a - mu), axis=-1, keepdims=True)
    a = (a - mu) / jnp.sqrt(var + _LN_EPS) * gamma + beta
    a = jax.nn.gelu(a, approximate=False)
    scores = jnp.einsum("bsh,h->bs", a, w2, precision=hp) + b2
    scores = jnp.where(mask == 0, -jnp.inf, scores.astype(jnp.float32))
    w = jax.nn.softmax(scores, axis=1)
    return jnp.einsum("bs,bsh->bh", w, x, precision=hp)


if __name__ == "__main__":
    key = jax.random.PRNGKey(0)
    kx, km, k1, k2, k3, k4, k5, k6 = jax.random.split(key, 8)

    B, S, H = 2, 8, 32

    def bf16_round(a):
        # Round MXU operands to bf16-representable f32 so the kernel's matmul
        # and the HIGHEST-precision XLA reference agree to ~f32 accumulation
        # error regardless of how many MXU passes the compiler picks.
        return a.astype(jnp.bfloat16).astype(jnp.float32)

    last_hidden_state = bf16_round(
        jax.random.normal(kx, (B, S, H), dtype=jnp.float32))
    attention_mask = (jax.random.uniform(km, (B, S)) > 0.3).astype(jnp.int32)
    attention_mask = attention_mask.at[:, 0].set(1)  # >=1 valid token per row

    w1 = bf16_round(jax.random.normal(k1, (H, H), dtype=jnp.float32)
                    / jnp.sqrt(jnp.float32(H)))
    b1 = 0.1 * jax.random.normal(k2, (H,), dtype=jnp.float32)
    ln_gamma = 1.0 + 0.1 * jax.random.normal(k3, (H,), dtype=jnp.float32)
    ln_beta = 0.1 * jax.random.normal(k4, (H,), dtype=jnp.float32)
    w2 = jax.random.normal(k5, (H,), dtype=jnp.float32) / jnp.sqrt(jnp.float32(H))
    b2 = 0.1 * jax.random.normal(k6, (), dtype=jnp.float32)

    out = attention_pooling(last_hidden_state, attention_mask,
                            w1, b1, ln_gamma, ln_beta, w2, b2)
    out = jax.block_until_ready(out)

    ref = _reference(last_hidden_state, attention_mask,
                     w1, b1, ln_gamma, ln_beta, w2, b2)

    assert out.shape == (B, H), out.shape
    max_err = float(jnp.max(jnp.abs(out - ref)))
    assert jnp.allclose(out, ref, atol=2e-4, rtol=2e-4), f"max_err={max_err}"

    print("KERNEL_OK")
</pallas_src>

<mosaic_0001>
module attributes {stable_mosaic.version = 11 : i64} {
  func.func @_attention_pooling_kernel(%arg0: i32, %arg1: i32, %arg2: memref<1x8x32xf32, #tpu.memory_space<vmem>>, %arg3: memref<1x8x1xi32, #tpu.memory_space<vmem>>, %arg4: memref<32x32xf32, #tpu.memory_space<vmem>>, %arg5: memref<1x32xf32, #tpu.memory_space<vmem>>, %arg6: memref<1x32xf32, #tpu.memory_space<vmem>>, %arg7: memref<1x32xf32, #tpu.memory_space<vmem>>, %arg8: memref<32x1xf32, #tpu.memory_space<vmem>>, %arg9: memref<1xf32, #tpu.memory_space<smem>>, %arg10: memref<1x1x32xf32, #tpu.memory_space<vmem>>, %arg11: memref<1x1xf32, #tpu.memory_space<vmem>>, %arg12: memref<1x1xf32, #tpu.memory_space<vmem>>, %arg13: memref<1x32xf32, #tpu.memory_space<vmem>>) attributes {dimension_semantics = [#tpu.dimension_semantics<parallel>, #tpu.dimension_semantics<arbitrary>], iteration_bounds = array<i64: 2, 1>, scalar_prefetch = 0 : i64, scratch_operands = 3 : i64, tpu.core_type = #tpu.core_type<tc>, window_params = [{transform_indices = @transform_0, window_bounds = array<i64: 1, 8, 32>}, {transform_indices = @transform_1, window_bounds = array<i64: 1, 8, 1>}, {pipeline_mode = #tpu.pipeline_mode<synchronous>, transform_indices = @transform_2, window_bounds = array<i64: 32, 32>}, {pipeline_mode = #tpu.pipeline_mode<synchronous>, transform_indices = @transform_3, window_bounds = array<i64: 1, 32>}, {pipeline_mode = #tpu.pipeline_mode<synchronous>, transform_indices = @transform_4, window_bounds = array<i64: 1, 32>}, {pipeline_mode = #tpu.pipeline_mode<synchronous>, transform_indices = @transform_5, window_bounds = array<i64: 1, 32>}, {pipeline_mode = #tpu.pipeline_mode<synchronous>, transform_indices = @transform_6, window_bounds = array<i64: 32, 1>}, {transform_indices = @transform_7, window_bounds = array<i64: 1>}, {transform_indices = @transform_8, window_bounds = array<i64: 1, 1, 32>}]} {
    %c0_i32 = arith.constant 0 : i32
    %0 = arith.cmpi eq, %arg1, %c0_i32 : i32
    %1 = arith.extui %0 : i1 to i32
    %c0_i32_0 = arith.constant 0 : i32
    %2 = arith.cmpi ne, %1, %c0_i32_0 : i32
    scf.if %2 {
      %cst_58 = arith.constant 0xFF800000 : f32
      %110 = vector.broadcast %cst_58 : f32 to vector<1x1xf32>
      %c0_59 = arith.constant 0 : index
      %c0_60 = arith.constant 0 : index
      %111 = vector.load %arg11[%c0_59, %c0_60] : memref<1x1xf32, #tpu.memory_space<vmem>>, vector<1x1xf32>
      tpu.vector_store %arg11[%c0_59, %c0_60], %110 {strides = array<i32>} : memref<1x1xf32, #tpu.memory_space<vmem>>, vector<1x1xf32>,
      %cst_61 = arith.constant 0.000000e+00 : f32
      %112 = vector.broadcast %cst_61 : f32 to vector<1x1xf32>
      %c0_62 = arith.constant 0 : index
      %c0_63 = arith.constant 0 : index
      %113 = vector.load %arg12[%c0_62, %c0_63] : memref<1x1xf32, #tpu.memory_space<vmem>>, vector<1x1xf32>
      tpu.vector_store %arg12[%c0_62, %c0_63], %112 {strides = array<i32>} : memref<1x1xf32, #tpu.memory_space<vmem>>, vector<1x1xf32>,
      %cst_64 = arith.constant 0.000000e+00 : f32
      %114 = vector.broadcast %cst_64 : f32 to vector<1x32xf32>
      %c0_65 = arith.constant 0 : index
      %c0_66 = arith.constant 0 : index
      %115 = vector.load %arg13[%c0_65, %c0_66] : memref<1x32xf32, #tpu.memory_space<vmem>>, vector<1x32xf32>
      tpu.vector_store %arg13[%c0_65, %c0_66], %114 {strides = array<i32>} : memref<1x32xf32, #tpu.memory_space<vmem>>, vector<1x32xf32>,
    } else {
    }
    %c0 = arith.constant 0 : index
    %c0_1 = arith.constant 0 : index
    %c0_2 = arith.constant 0 : index
    %3 = vector.load %arg2[%c0, %c0_1, %c0_2] : memref<1x8x32xf32, #tpu.memory_space<vmem>>, vector<1x8x32xf32>
    %4 = vector.shape_cast %3 : vector<1x8x32xf32> to vector<8x32xf32>
    %c0_3 = arith.constant 0 : index
    %c0_4 = arith.constant 0 : index
    %5 = vector.load %arg4[%c0_3, %c0_4] : memref<32x32xf32, #tpu.memory_space<vmem>>, vector<32x32xf32>
    %cst = arith.constant dense<0.000000e+00> : vector<8x32xf32>
    %6 = tpu.matmul %4, %5, %cst {dimension_numbers = #tpu.dot_dimension_numbers<[1], [0], [0], [1], [0, 0, 1, 1], [], []>, precision = #tpu.contract_precision<fp32>} : vector<8x32xf32>, vector<32x32xf32>, vector<8x32xf32> -> vector<8x32xf32>
    %c0_5 = arith.constant 0 : index
    %c0_6 = arith.constant 0 : index
    %7 = vector.load %arg5[%c0_5, %c0_6] : memref<1x32xf32, #tpu.memory_space<vmem>>, vector<1x32xf32>
    %8 = vector.broadcast %7 : vector<1x32xf32> to vector<8x32xf32>
    %9 = arith.addf %6, %8 : vector<8x32xf32>
    %cst_7 = arith.constant dense<0.000000e+00> : vector<8xf32>
    %10 = vector.multi_reduction <add>, %9, %cst_7 [1] : vector<8x32xf32> to vector<8xf32>
    %11 = vector.shape_cast %10 : vector<8xf32> to vector<8x1xf32>
    %cst_8 = arith.constant 3.200000e+01 : f32
    %12 = vector.broadcast %cst_8 : f32 to vector<8x1xf32>
    %13 = arith.divf %11, %12 : vector<8x1xf32>
    %14 = vector.broadcast %13 : vector<8x1xf32> to vector<8x32xf32>
    %15 = arith.subf %9, %14 : vector<8x32xf32>
    %16 = arith.mulf %15, %15 : vector<8x32xf32>
    %cst_9 = arith.constant dense<0.000000e+00> : vector<8xf32>
    %17 = vector.multi_reduction <add>, %16, %cst_9 [1] : vector<8x32xf32> to vector<8xf32>
    %18 = vector.shape_cast %17 : vector<8xf32> to vector<8x1xf32>
    %cst_10 = arith.constant 3.200000e+01 : f32
    %19 = vector.broadcast %cst_10 : f32 to vector<8x1xf32>
    %20 = arith.divf %18, %19 : vector<8x1xf32>
    %cst_11 = arith.constant 9.99999974E-6 : f32
    %21 = vector.broadcast %cst_11 : f32 to vector<8x1xf32>
    %22 = arith.addf %20, %21 : vector<8x1xf32>
    %23 = math.rsqrt %22 : vector<8x1xf32>
    %24 = vector.broadcast %23 : vector<8x1xf32> to vector<8x32xf32>
    %25 = arith.mulf %15, %24 : vector<8x32xf32>
    %c0_12 = arith.constant 0 : index
    %c0_13 = arith.constant 0 : index
    %26 = vector.load %arg6[%c0_12, %c0_13] : memref<1x32xf32, #tpu.memory_space<vmem>>, vector<1x32xf32>
    %27 = vector.broadcast %26 : vector<1x32xf32> to vector<8x32xf32>
    %28 = arith.mulf %25, %27 : vector<8x32xf32>
    %c0_14 = arith.constant 0 : index
    %c0_15 = arith.constant 0 : index
    %29 = vector.load %arg7[%c0_14, %c0_15] : memref<1x32xf32, #tpu.memory_space<vmem>>, vector<1x32xf32>
    %30 = vector.broadcast %29 : vector<1x32xf32> to vector<8x32xf32>
    %31 = arith.addf %28, %30 : vector<8x32xf32>
    %cst_16 = arith.constant 5.000000e-01 : f32
    %32 = vector.broadcast %cst_16 : f32 to vector<8x32xf32>
    %33 = arith.mulf %32, %31 : vector<8x32xf32>
    %cst_17 = arith.constant 0.707106769 : f32
    %34 = vector.broadcast %cst_17 : f32 to vector<8x32xf32>
    %35 = arith.mulf %31, %34 : vector<8x32xf32>
    %36 = math.absf %35 : vector<8x32xf32>
    %cst_18 = arith.constant 0.327591091 : f32
    %37 = vector.broadcast %cst_18 : f32 to vector<8x32xf32>
    %38 = arith.mulf %37, %36 : vector<8x32xf32>
    %cst_19 = arith.constant 1.000000e+00 : f32
    %39 = vector.broadcast %cst_19 : f32 to vector<8x32xf32>
    %40 = arith.addf %39, %38 : vector<8x32xf32>
    %cst_20 = arith.constant 1.000000e+00 : f32
    %41 = vector.broadcast %cst_20 : f32 to vector<8x32xf32>
    %42 = arith.divf %41, %40 : vector<8x32xf32>
    %cst_21 = arith.constant 1.06140542 : f32
    %43 = vector.broadcast %cst_21 : f32 to vector<8x32xf32>
    %44 = arith.mulf %43, %42 : vector<8x32xf32>
    %cst_22 = arith.constant -1.45315206 : f32
    %45 = vector.broadcast %cst_22 : f32 to vector<8x32xf32>
    %46 = arith.addf %44, %45 : vector<8x32xf32>
    %47 = arith.mulf %46, %42 : vector<8x32xf32>
    %cst_23 = arith.constant 1.42141378 : f32
    %48 = vector.broadcast %cst_23 : f32 to vector<8x32xf32>
    %49 = arith.addf %47, %48 : vector<8x32xf32>
    %50 = arith.mulf %49, %42 : vector<8x32xf32>
    %cst_24 = arith.constant -0.284496725 : f32
    %51 = vector.broadcast %cst_24 : f32 to vector<8x32xf32>
    %52 = arith.addf %50, %51 : vector<8x32xf32>
    %53 = arith.mulf %52, %42 : vector<8x32xf32>
    %cst_25 = arith.constant 0.254829586 : f32
    %54 = vector.broadcast %cst_25 : f32 to vector<8x32xf32>
    %55 = arith.addf %53, %54 : vector<8x32xf32>
    %56 = arith.mulf %55, %42 : vector<8x32xf32>
    %57 = arith.mulf %36, %36 : vector<8x32xf32>
    %cst_26 = arith.constant 0.000000e+00 : f32
    %58 = vector.broadcast %cst_26 : f32 to vector<8x32xf32>
    %59 = arith.subf %58, %57 : vector<8x32xf32>
    %60 = math.exp %59 : vector<8x32xf32>
    %61 = arith.mulf %56, %60 : vector<8x32xf32>
    %cst_27 = arith.constant 1.000000e+00 : f32
    %62 = vector.broadcast %cst_27 : f32 to vector<8x32xf32>
    %63 = arith.subf %62, %61 : vector<8x32xf32>
    %cst_28 = arith.constant 0.000000e+00 : f32
    %64 = vector.broadcast %cst_28 : f32 to vector<8x32xf32>
    %65 = arith.cmpf olt, %35, %64 : vector<8x32xf32>
    %cst_29 = arith.constant 0.000000e+00 : f32
    %66 = vector.broadcast %cst_29 : f32 to vector<8x32xf32>
    %67 = arith.subf %66, %63 : vector<8x32xf32>
    %68 = arith.select %65, %67, %63 : vector<8x32xi1>, vector<8x32xf32>
    %cst_30 = arith.constant 1.000000e+00 : f32
    %69 = vector.broadcast %cst_30 : f32 to vector<8x32xf32>
    %70 = arith.addf %69, %68 : vector<8x32xf32>
    %71 = arith.mulf %33, %70 : vector<8x32xf32>
    %c0_31 = arith.constant 0 : index
    %c0_32 = arith.constant 0 : index
    %72 = vector.load %arg8[%c0_31, %c0_32] : memref<32x1xf32, #tpu.memory_space<vmem>>, vector<32x1xf32>
    %cst_33 = arith.constant dense<0.000000e+00> : vector<8x1xf32>
    %73 = tpu.matmul %71, %72, %cst_33 {dimension_numbers = #tpu.dot_dimension_numbers<[1], [0], [0], [1], [0, 0, 1, 1], [], []>, precision = #tpu.contract_precision<fp32>} : vector<8x32xf32>, vector<32x1xf32>, vector<8x1xf32> -> vector<8x1xf32>
    %c0_34 = arith.constant 0 : index
    %74 = memref.load %arg9[%c0_34] : memref<1xf32, #tpu.memory_space<smem>>
    %75 = vector.broadcast %74 : f32 to vector<8x1xf32>
    %76 = arith.addf %73, %75 : vector<8x1xf32>
    %c0_35 = arith.constant 0 : index
    %c0_36 = arith.constant 0 : index
    %c0_37 = arith.constant 0 : index
    %77 = vector.load %arg3[%c0_35, %c0_36, %c0_37] : memref<1x8x1xi32, #tpu.memory_space<vmem>>, vector<1x8x1xi32>
    %78 = vector.shape_cast %77 : vector<1x8x1xi32> to vector<8x1xi32>
    %c0_i32_38 = arith.constant 0 : i32
    %79 = vector.broadcast %c0_i32_38 : i32 to vector<8x1xi32>
    %80 = arith.cmpi eq, %78, %79 : vector<8x1xi32>
    %cst_39 = arith.constant 0xFF800000 : f32
    %81 = vector.broadcast %cst_39 : f32 to vector<8x1xf32>
    %82 = arith.select %80, %81, %76 : vector<8x1xi1>, vector<8x1xf32>
    %c0_40 = arith.constant 0 : index
    %c0_41 = arith.constant 0 : index
    %83 = vector.load %arg11[%c0_40, %c0_41] : memref<1x1xf32, #tpu.memory_space<vmem>>, vector<1x1xf32>
    %cst_42 = arith.constant dense<0xFF800000> : vector<1xf32>
    %84 = vector.multi_reduction <maximumf>, %82, %cst_42 [0] : vector<8x1xf32> to vector<1xf32>
    %85 = vector.shape_cast %84 : vector<1xf32> to vector<1x1xf32>
    %86 = arith.maximumf %83, %85 : vector<1x1xf32>
    %cst_43 = arith.constant -1.000000e+30 : f32
    %87 = vector.broadcast %cst_43 : f32 to vector<1x1xf32>
    %88 = arith.maximumf %86, %87 : vector<1x1xf32>
    %89 = arith.subf %83, %88 : vector<1x1xf32>
    %90 = math.exp %89 : vector<1x1xf32>
    %91 = vector.broadcast %88 : vector<1x1xf32> to vector<8x1xf32>
    %92 = arith.subf %82, %91 : vector<8x1xf32>
    %93 = math.exp %92 : vector<8x1xf32>
    %c0_44 = arith.constant 0 : index
    %c0_45 = arith.constant 0 : index
    %94 = vector.load %arg12[%c0_44, %c0_45] : memref<1x1xf32, #tpu.memory_space<vmem>>, vector<1x1xf32>
    %95 = arith.mulf %90, %94 : vector<1x1xf32>
    %cst_46 = arith.constant dense<0.000000e+00> : vector<1xf32>
    %96 = vector.multi_reduction <add>, %93, %cst_46 [0] : vector<8x1xf32> to vector<1xf32>
    %97 = vector.shape_cast %96 : vector<1xf32> to vector<1x1xf32>
    %98 = arith.addf %95, %97 : vector<1x1xf32>
    %c0_47 = arith.constant 0 : index
    %c0_48 = arith.constant 0 : index
    %99 = vector.load %arg12[%c0_47, %c0_48] : memref<1x1xf32, #tpu.memory_space<vmem>>, vector<1x1xf32>
    tpu.vector_store %arg12[%c0_47, %c0_48], %98 {strides = array<i32>} : memref<1x1xf32, #tpu.memory_space<vmem>>, vector<1x1xf32>,
    %cst_49 = arith.constant dense<0.000000e+00> : vector<1x32xf32>
    %100 = tpu.matmul %93, %4, %cst_49 {dimension_numbers = #tpu.dot_dimension_numbers<[0], [0], [1], [1], [0, 1, 1, 1], [], []>, precision = #tpu.contract_precision<fp32>} : vector<8x1xf32>, vector<8x32xf32>, vector<1x32xf32> -> vector<1x32xf32>
    %c0_50 = arith.constant 0 : index
    %c0_51 = arith.constant 0 : index
    %101 = vector.load %arg13[%c0_50, %c0_51] : memref<1x32xf32, #tpu.memory_space<vmem>>, vector<1x32xf32>
    %102 = vector.broadcast %90 : vector<1x1xf32> to vector<1x32xf32>
    %103 = arith.mulf %102, %101 : vector<1x32xf32>
    %104 = arith.addf %103, %100 : vector<1x32xf32>
    %c0_52 = arith.constant 0 : index
    %c0_53 = arith.constant 0 : index
    %105 = vector.load %arg13[%c0_52, %c0_53] : memref<1x32xf32, #tpu.memory_space<vmem>>, vector<1x32xf32>
    tpu.vector_store %arg13[%c0_52, %c0_53], %104 {strides = array<i32>} : memref<1x32xf32, #tpu.memory_space<vmem>>, vector<1x32xf32>,
    %c0_54 = arith.constant 0 : index
    %c0_55 = arith.constant 0 : index
    %106 = vector.load %arg11[%c0_54, %c0_55] : memref<1x1xf32, #tpu.memory_space<vmem>>, vector<1x1xf32>
    tpu.vector_store %arg11[%c0_54, %c0_55], %86 {strides = array<i32>} : memref<1x1xf32, #tpu.memory_space<vmem>>, vector<1x1xf32>,
    %c0_i32_56 = arith.constant 0 : i32
    %107 = arith.cmpi eq, %arg1, %c0_i32_56 : i32
    %108 = arith.extui %107 : i1 to i32
    %c0_i32_57 = arith.constant 0 : i32
    %109 = arith.cmpi ne, %108, %c0_i32_57 : i32
    scf.if %109 {
      %c0_58 = arith.constant 0 : index
      %c0_59 = arith.constant 0 : index
      %110 = vector.load %arg13[%c0_58, %c0_59] : memref<1x32xf32, #tpu.memory_space<vmem>>, vector<1x32xf32>
      %c0_60 = arith.constant 0 : index
      %c0_61 = arith.constant 0 : index
      %111 = vector.load %arg12[%c0_60, %c0_61] : memref<1x1xf32, #tpu.memory_space<vmem>>, vector<1x1xf32>
      %cst_62 = arith.constant 1.000000e+00 : f32
      %112 = vector.broadcast %cst_62 : f32 to vector<1x1xf32>
      %113 = arith.divf %112, %111 : vector<1x1xf32>
      %114 = vector.broadcast %113 : vector<1x1xf32> to vector<1x32xf32>
      %115 = arith.mulf %110, %114 : vector<1x32xf32>
      %c0_63 = arith.constant 0 : index
      %c0_64 = arith.constant 0 : index
      %c0_65 = arith.constant 0 : index
      %116 = vector.load %arg10[%c0_63, %c0_64, %c0_65] : memref<1x1x32xf32, #tpu.memory_space<vmem>>, vector<1x1x32xf32>
      %117 = vector.shape_cast %116 : vector<1x1x32xf32> to vector<1x32xf32>
      %118 = vector.shape_cast %115 : vector<1x32xf32> to vector<1x1x32xf32>
      tpu.vector_store %arg10[%c0_63, %c0_64, %c0_65], %118 {strides = array<i32>} : memref<1x1x32xf32, #tpu.memory_space<vmem>>, vector<1x1x32xf32>,
    } else {
    }
    return
  }
  func.func @transform_0(%arg0: i32, %arg1: i32) -> (i32, i32, i32) {
    %c0_i32 = arith.constant 0 : i32
    %c0_i32_0 = arith.constant 0 : i32
    return %arg0, %arg1, %c0_i32 : i32, i32, i32
  }
  func.func @transform_1(%arg0: i32, %arg1: i32) -> (i32, i32, i32) {
    %c0_i32 = arith.constant 0 : i32
    %c0_i32_0 = arith.constant 0 : i32
    return %arg0, %arg1, %c0_i32 : i32, i32, i32
  }
  func.func @transform_2(%arg0: i32, %arg1: i32) -> (i32, i32) {
    %c0_i32 = arith.constant 0 : i32
    %c0_i32_0 = arith.constant 0 : i32
    %c0_i32_1 = arith.constant 0 : i32
    return %c0_i32, %c0_i32_0 : i32, i32
  }
  func.func @transform_3(%arg0: i32, %arg1: i32) -> (i32, i32) {
    %c0_i32 = arith.constant 0 : i32
    %c0_i32_0 = arith.constant 0 : i32
    %c0_i32_1 = arith.constant 0 : i32
    return %c0_i32, %c0_i32_0 : i32, i32
  }
  func.func @transform_4(%arg0: i32, %arg1: i32) -> (i32, i32) {
    %c0_i32 = arith.constant 0 : i32
    %c0_i32_0 = arith.constant 0 : i32
    %c0_i32_1 = arith.constant 0 : i32
    return %c0_i32, %c0_i32_0 : i32, i32
  }
  func.func @transform_5(%arg0: i32, %arg1: i32) -> (i32, i32) {
    %c0_i32 = arith.constant 0 : i32
    %c0_i32_0 = arith.constant 0 : i32
    %c0_i32_1 = arith.constant 0 : i32
    return %c0_i32, %c0_i32_0 : i32, i32
  }
  func.func @transform_6(%arg0: i32, %arg1: i32) -> (i32, i32) {
    %c0_i32 = arith.constant 0 : i32
    %c0_i32_0 = arith.constant 0 : i32
    %c0_i32_1 = arith.constant 0 : i32
    return %c0_i32, %c0_i32_0 : i32, i32
  }
  func.func @transform_7(%arg0: i32, %arg1: i32) -> i32 {
    %c0_i32 = arith.constant 0 : i32
    %c0_i32_0 = arith.constant 0 : i32
    return %c0_i32 : i32
  }
  func.func @transform_8(%arg0: i32, %arg1: i32) -> (i32, i32, i32) {
    %c0_i32 = arith.constant 0 : i32
    %c0_i32_0 = arith.constant 0 : i32
    %c0_i32_1 = arith.constant 0 : i32
    return %arg0, %c0_i32, %c0_i32_0 : i32, i32, i32
  }
}

</mosaic_0001>

<llo_original>
// kernel: tpu_custom_call.1
$region0: #{tpu_custom_call.1}
  #allocation0 [shape = 'u32[]', space=smem, size = 0x4, offset = 0x4, fixed_abs, tag = 'smem constant byte address 0x4 - core index']
  #allocation1 [shape = 'u32[144,128]{1,0:T(1,128)}', space=vmem, size = 0x12000, scoped, tag = 'internal scratch']
  #allocation2 [shape = 'f32[1,1]{1,0:T(1,128)}', space=vmem, size = 0x200, scoped, tag = 'scratch operand']
  #allocation3 [shape = 'f32[1,1]{1,0:T(1,128)}', space=vmem, size = 0x200, scoped, tag = 'scratch operand']
  #allocation4 [shape = 'f32[1,32]{1,0:T(1,128)}', space=vmem, size = 0x200, scoped, tag = 'scratch operand']
  #allocation5 [shape = 'f32[1]{0:T(128)S(6)}', space=smem, size = 0x200, scoped, tag = 'scoped memory for tpu_custom_call.1']
  %s0 = inlined_call_operand.vmem [shape: f32[2,8,32], index: 0, kind: input, shape index: {}]
  %s1 = inlined_call_operand.vmem [shape: s32[2,8,1], index: 1, kind: input, shape index: {}]
  %s2 = inlined_call_operand.vmem [shape: f32[32,32], index: 2, kind: input, shape index: {}]
  %s3 = inlined_call_operand.vmem [shape: f32[1,32], index: 3, kind: input, shape index: {}]
  %s4 = inlined_call_operand.vmem [shape: f32[1,32], index: 4, kind: input, shape index: {}]
  %s5 = inlined_call_operand.vmem [shape: f32[1,32], index: 5, kind: input, shape index: {}]
  %s6 = inlined_call_operand.vmem [shape: f32[32,1], index: 6, kind: input, shape index: {}]
  %s7 = inlined_call_operand.<no memory space> [shape: f32[1], index: 7, kind: input, shape index: {}]
  %s8 = inlined_call_operand.hbm [shape: f32[2,1,32], index: 8, kind: output, shape index: {}]
  %s9 = sld [smem:[#allocation0]]
  $region73: #{tpu_custom_call.1} parent=0
    _
  %s11 = ssub.s32 1, %s9
  %s12 = scalar_select 0, %s11, %s9
  %13 = sst [smem:[#allocation5]] %s7
  $region1: #{tpu_custom_call.1} parent=0
    #allocation6 [shape = 'u8[1024]{0}', space=vmem, size = 0x400, scoped, tag = 'output window, operand 0']
    #allocation7 [shape = 's32[2]{0}', space=sflag, size = 0x8, scoped, tag = 'scoped memory for tpu_custom_call.1']
    %14 = vsyncpa [#allocation7], 0
    %s15 = scalar_lea.sflag [#allocation7], 1
    %16 = vsyncpa %s15, 0
    loop: start=0, step=1, limit=4
    $region2: #{tpu_custom_call.1} parent=1 // loop_pre_header
      _
    $region3: #{tpu_custom_call.1} parent=1 // loop_header
      %s18 = sphi 0, %s22
      %p19 = scmp.ge.s32.totalorder %s18, 4
      %s25 = sphi 0, %s37
      %s26 = sphi 0, %s33
      %s27 = sphi 0, %s25
      %s28 = sphi 0, %s26
      %s29 = sphi 0, %s27
      %s30 = sphi 0, %s28
      %s42 = sphi 0, %s44
      %s45 = sphi 0, %s42
      %s46 = sphi 0, %s45
      %s62 = sphi 0, %s46
      %s70 = sphi 0, %s72
      %s73 = sphi 0, %s70
      %s74 = sphi 0, %s73
      %s90 = sphi 0, %s74
      %s94 = sphi 0, %s94
      %s96 = sphi 0, %s94
      %s97 = sphi 0, %s96
      %s111 = sphi 0, %s97
      %s115 = sphi 0, %s115
      %s117 = sphi 0, %s115
      %s118 = sphi 0, %s117
      %s132 = sphi 0, %s118
      %s136 = sphi 0, %s136
      %s138 = sphi 0, %s136
      %s139 = sphi 0, %s138
      %s153 = sphi 0, %s139
      %s157 = sphi 0, %s157
      %s159 = sphi 0, %s157
      %s160 = sphi 0, %s159
      %s174 = sphi 0, %s160
      %s178 = sphi 0, %s178
      %s180 = sphi 0, %s178
      %s181 = sphi 0, %s180
      %s195 = sphi 0, %s181
      %s199 = sphi 0, %s199
      %s201 = sphi 0, %s199
      %s202 = sphi 0, %s201
      %s216 = sphi 0, %s202
      %s222 = sphi 0, %s224
      %s225 = sphi 0, %s222
      %s226 = sphi 0, %s225
      %s242 = sphi 0, %s226
    $region4: #{tpu_custom_call.1} parent=1 // loop_header_branch
      %21 = sbr.rel (%p19) target = $region8
    $region5: #{tpu_custom_call.1} parent=1 // loop_body
      %s23 = ssub.s32 %s18, 1
      %s24 = ssub.s32 %s18, 2
      %s31 = sadd.s32 1, %s26
      %p32 = scmp.ge.s32.totalorder %s31, 1
      %s33 = scalar_select %p32, 0, %s31
      %s34 = sadd.s32 1, %s25
      %s35 = scalar_select %p32, %s34, %s25
      %p36 = scmp.ge.s32.totalorder %s35, 2
      %s37 = scalar_select %p36, 0, %s35
      %s38 = ssub.s32 %s25, %s37
      %s39 = ssub.s32 %s26, %s33
      %s40 = sor.u32 %s38, %s39
      %p41 = scmp.eq.s32.totalorder %s40, 0
      %s43 = sadd.s32 %s42, 1
      %s44 = scalar_select %p41, %s42, %s43
      %p47 = pneg %p41
      %p48 = scmp.eq.s32.totalorder %s18, 1
      %p49 = por %p47, %p48
      %p50 = scmp.ne.s32.totalorder %s42, %s45
      %p51 = scmp.eq.s32.totalorder %s18, 0
      %p52 = por %p50, %p51
      %p53 = scmp.ne.s32.totalorder %s42, %s45
      %p54 = scmp.eq.s32.totalorder %s23, 1
      %p55 = por %p53, %p54
      %p56 = scmp.ne.s32.totalorder %s45, %s46
      %p57 = scmp.eq.s32.totalorder %s23, 0
      %p58 = por %p56, %p57
      %p59 = scmp.ne.s32.totalorder %s45, %s46
      %p60 = scmp.eq.s32.totalorder %s24, 1
      %p61 = por %p59, %p60
      %p63 = scmp.ne.s32.totalorder %s46, %s62
      %p64 = scmp.eq.s32.totalorder %s24, 0
      %p65 = por %p63, %p64
      %s66 = ssub.s32 %s25, %s37
      %s67 = ssub.s32 %s26, %s33
      %s68 = sor.u32 %s66, %s67
      %p69 = scmp.eq.s32.totalorder %s68, 0
      %s71 = sadd.s32 %s70, 1
      %s72 = scalar_select %p69, %s70, %s71
      %p75 = pneg %p69
      %p76 = scmp.eq.s32.totalorder %s18, 1
      %p77 = por %p75, %p76
      %p78 = scmp.ne.s32.totalorder %s70, %s73
      %p79 = scmp.eq.s32.totalorder %s18, 0
      %p80 = por %p78, %p79
      %p81 = scmp.ne.s32.totalorder %s70, %s73
      %p82 = scmp.eq.s32.totalorder %s23, 1
      %p83 = por %p81, %p82
      %p84 = scmp.ne.s32.totalorder %s73, %s74
      %p85 = scmp.eq.s32.totalorder %s23, 0
      %p86 = por %p84, %p85
      %p87 = scmp.ne.s32.totalorder %s73, %s74
      %p88 = scmp.eq.s32.totalorder %s24, 1
      %p89 = por %p87, %p88
      %p91 = scmp.ne.s32.totalorder %s74, %s90
      %p92 = scmp.eq.s32.totalorder %s24, 0
      %p93 = por %p91, %p92
      %s95 = sadd.s32 %s94, 1
      %p98 = scmp.eq.s32.totalorder %s18, 1
      %p99 = scmp.ne.s32.totalorder %s94, %s96
      %p100 = scmp.eq.s32.totalorder %s18, 0
      %p101 = por %p99, %p100
      %p102 = scmp.ne.s32.totalorder %s94, %s96
      %p103 = scmp.eq.s32.totalorder %s23, 1
      %p104 = por %p102, %p103
      %p105 = scmp.ne.s32.totalorder %s96, %s97
      %p106 = scmp.eq.s32.totalorder %s23, 0
      %p107 = por %p105, %p106
      %p108 = scmp.ne.s32.totalorder %s96, %s97
      %p109 = scmp.eq.s32.totalorder %s24, 1
      %p110 = por %p108, %p109
      %p112 = scmp.ne.s32.totalorder %s97, %s111
      %p113 = scmp.eq.s32.totalorder %s24, 0
      %p114 = por %p112, %p113
      %s116 = sadd.s32 %s115, 1
      %p119 = scmp.eq.s32.totalorder %s18, 1
      %p120 = scmp.ne.s32.totalorder %s115, %s117
      %p121 = scmp.eq.s32.totalorder %s18, 0
      %p122 = por %p120, %p121
      %p123 = scmp.ne.s32.totalorder %s115, %s117
      %p124 = scmp.eq.s32.totalorder %s23, 1
      %p125 = por %p123, %p124
      %p126 = scmp.ne.s32.totalorder %s117, %s118
      %p127 = scmp.eq.s32.totalorder %s23, 0
      %p128 = por %p126, %p127
      %p129 = scmp.ne.s32.totalorder %s117, %s118
      %p130 = scmp.eq.s32.totalorder %s24, 1
      %p131 = por %p129, %p130
      %p133 = scmp.ne.s32.totalorder %s118, %s132
      %p134 = scmp.eq.s32.totalorder %s24, 0
      %p135 = por %p133, %p134
      %s137 = sadd.s32 %s136, 1
      %p140 = scmp.eq.s32.totalorder %s18, 1
      %p141 = scmp.ne.s32.totalorder %s136, %s138
      %p142 = scmp.eq.s32.totalorder %s18, 0
      %p143 = por %p141, %p142
      %p144 = scmp.ne.s32.totalorder %s136, %s138
      %p145 = scmp.eq.s32.totalorder %s23, 1
      %p146 = por %p144, %p145
      %p147 = scmp.ne.s32.totalorder %s138, %s139
      %p148 = scmp.eq.s32.totalorder %s23, 0
      %p149 = por %p147, %p148
      %p150 = scmp.ne.s32.totalorder %s138, %s139
      %p151 = scmp.eq.s32.totalorder %s24, 1
      %p152 = por %p150, %p151
      %p154 = scmp.ne.s32.totalorder %s139, %s153
      %p155 = scmp.eq.s32.totalorder %s24, 0
      %p156 = por %p154, %p155
      %s158 = sadd.s32 %s157, 1
      %p161 = scmp.eq.s32.totalorder %s18, 1
      %p162 = scmp.ne.s32.totalorder %s157, %s159
      %p163 = scmp.eq.s32.totalorder %s18, 0
      %p164 = por %p162, %p163
      %p165 = scmp.ne.s32.totalorder %s157, %s159
      %p166 = scmp.eq.s32.totalorder %s23, 1
      %p167 = por %p165, %p166
      %p168 = scmp.ne.s32.totalorder %s159, %s160
      %p169 = scmp.eq.s32.totalorder %s23, 0
      %p170 = por %p168, %p169
      %p171 = scmp.ne.s32.totalorder %s159, %s160
      %p172 = scmp.eq.s32.totalorder %s24, 1
      %p173 = por %p171, %p172
      %p175 = scmp.ne.s32.totalorder %s160, %s174
      %p176 = scmp.eq.s32.totalorder %s24, 0
      %p177 = por %p175, %p176
      %s179 = sadd.s32 %s178, 1
      %p182 = scmp.eq.s32.totalorder %s18, 1
      %p183 = scmp.ne.s32.totalorder %s178, %s180
      %p184 = scmp.eq.s32.totalorder %s18, 0
      %p185 = por %p183, %p184
      %p186 = scmp.ne.s32.totalorder %s178, %s180
      %p187 = scmp.eq.s32.totalorder %s23, 1
      %p188 = por %p186, %p187
      %p189 = scmp.ne.s32.totalorder %s180, %s181
      %p190 = scmp.eq.s32.totalorder %s23, 0
      %p191 = por %p189, %p190
      %p192 = scmp.ne.s32.totalorder %s180, %s181
      %p193 = scmp.eq.s32.totalorder %s24, 1
      %p194 = por %p192, %p193
      %p196 = scmp.ne.s32.totalorder %s181, %s195
      %p197 = scmp.eq.s32.totalorder %s24, 0
      %p198 = por %p196, %p197
      %s200 = sadd.s32 %s199, 1
      %p203 = scmp.eq.s32.totalorder %s18, 1
      %p204 = scmp.ne.s32.totalorder %s199, %s201
      %p205 = scmp.eq.s32.totalorder %s18, 0
      %p206 = por %p204, %p205
      %p207 = scmp.ne.s32.totalorder %s199, %s201
      %p208 = scmp.eq.s32.totalorder %s23, 1
      %p209 = por %p207, %p208
      %p210 = scmp.ne.s32.totalorder %s201, %s202
      %p211 = scmp.eq.s32.totalorder %s23, 0
      %p212 = por %p210, %p211
      %p213 = scmp.ne.s32.totalorder %s201, %s202
      %p214 = scmp.eq.s32.totalorder %s24, 1
      %p215 = por %p213, %p214
      %p217 = scmp.ne.s32.totalorder %s202, %s216
      %p218 = scmp.eq.s32.totalorder %s24, 0
      %p219 = por %p217, %p218
      %s220 = ssub.s32 %s25, %s37
      %p221 = scmp.eq.s32.totalorder %s220, 0
      %s223 = sadd.s32 %s222, 1
      %s224 = scalar_select %p221, %s222, %s223
      %p227 = pneg %p221
      %p228 = scmp.eq.s32.totalorder %s18, 1
      %p229 = por %p227, %p228
      %p230 = scmp.ne.s32.totalorder %s222, %s225
      %p231 = scmp.eq.s32.totalorder %s18, 0
      %p232 = por %p230, %p231
      %p233 = scmp.ne.s32.totalorder %s222, %s225
      %p234 = scmp.eq.s32.totalorder %s23, 1
      %p235 = por %p233, %p234
      %p236 = scmp.ne.s32.totalorder %s225, %s226
      %p237 = scmp.eq.s32.totalorder %s23, 0
      %p238 = por %p236, %p237
      %p239 = scmp.ne.s32.totalorder %s225, %s226
      %p240 = scmp.eq.s32.totalorder %s24, 1
      %p241 = por %p239, %p240
      %p243 = scmp.ne.s32.totalorder %s226, %s242
      %p244 = scmp.eq.s32.totalorder %s24, 0
      %p245 = por %p243, %p244
      %p246 = scmp.le.s32.totalorder 1, %s18
      %p247 = scmp.lt.s32.totalorder %s18, 3
      %p248 = pnand %p246, %p247
      %p249 = pneg %p248
      // Predicated region
      $region9: #{tpu_custom_call.1} parent=5 // pred_check
        _
      $region10: #{tpu_custom_call.1} parent=5 // pred_check_branch
        %251 = sbr.rel (%p248) target = $region12
      $region11: #{tpu_custom_call.1} parent=5 // pred_region
        %s252 = ssub.s32 %s18, 1
        // Predicated region
        $region13: #{tpu_custom_call.1} parent=11 // pred_check
          %p253 = pneg %p107
        $region14: #{tpu_custom_call.1} parent=11 // pred_check_branch
          %255 = sbr.rel (%p253) target = $region16
        $region15: #{tpu_custom_call.1} parent=11 // pred_region
          _
        $region16: #{tpu_custom_call.1} parent=11 // pred_fallthru
          _
        // Predicated region
        $region17: #{tpu_custom_call.1} parent=11 // pred_check
          %p256 = pneg %p128
        $region18: #{tpu_custom_call.1} parent=11 // pred_check_branch
          %258 = sbr.rel (%p256) target = $region20
        $region19: #{tpu_custom_call.1} parent=11 // pred_region
          _
        $region20: #{tpu_custom_call.1} parent=11 // pred_fallthru
          _
        // Predicated region
        $region21: #{tpu_custom_call.1} parent=11 // pred_check
          %p259 = pneg %p149
        $region22: #{tpu_custom_call.1} parent=11 // pred_check_branch
          %261 = sbr.rel (%p259) target = $region24
        $region23: #{tpu_custom_call.1} parent=11 // pred_region
          _
        $region24: #{tpu_custom_call.1} parent=11 // pred_fallthru
          _
        // Predicated region
        $region25: #{tpu_custom_call.1} parent=11 // pred_check
          %p262 = pneg %p170
        $region26: #{tpu_custom_call.1} parent=11 // pred_check_branch
          %264 = sbr.rel (%p262) target = $region28
        $region27: #{tpu_custom_call.1} parent=11 // pred_region
          _
        $region28: #{tpu_custom_call.1} parent=11 // pred_fallthru
          _
        // Predicated region
        $region29: #{tpu_custom_call.1} parent=11 // pred_check
          %p265 = pneg %p191
        $region30: #{tpu_custom_call.1} parent=11 // pred_check_branch
          %267 = sbr.rel (%p265) target = $region32
        $region31: #{tpu_custom_call.1} parent=11 // pred_region
          _
        $region32: #{tpu_custom_call.1} parent=11 // pred_fallthru
          _
        // Predicated region
        $region33: #{tpu_custom_call.1} parent=11 // pred_check
          %p268 = pneg %p212
        $region34: #{tpu_custom_call.1} parent=11 // pred_check_branch
          %270 = sbr.rel (%p268) target = $region36
        $region35: #{tpu_custom_call.1} parent=11 // pred_region
          _
        $region36: #{tpu_custom_call.1} parent=11 // pred_fallthru
          _
      $region12: #{tpu_custom_call.1} parent=5 // pred_fallthru
        _
      %p271 = scmp.lt.s32.totalorder %s18, 2
      // Predicated region
      $region37: #{tpu_custom_call.1} parent=5 // pred_check
        %p272 = pneg %p271
      $region38: #{tpu_custom_call.1} parent=5 // pred_check_branch
        %274 = sbr.rel (%p272) target = $region40
      $region39: #{tpu_custom_call.1} parent=5 // pred_region
        // Predicated region
        $region41: #{tpu_custom_call.1} parent=39 // pred_check
          %p275 = pneg %p52
        $region42: #{tpu_custom_call.1} parent=39 // pred_check_branch
          %277 = sbr.rel (%p275) target = $region44
        $region43: #{tpu_custom_call.1} parent=39 // pred_region
          %p278 = scmp.lt.s32.totalorder %s25, 1
          %s279 = scalar_select %p278, %s25, 1
          %p280 = scmp.lt.s32.totalorder %s26, 0
          %s281 = scalar_select %p280, %s26, 0
          %s282 = sadd.s32 %s281, %s279
          %s283 = smul.addr %s282, 8
          %s284 = scalar_lea.vmem %s0, %s283
        $region44: #{tpu_custom_call.1} parent=39 // pred_fallthru
          _
        // Predicated region
        $region45: #{tpu_custom_call.1} parent=39 // pred_check
          %p285 = pneg %p80
        $region46: #{tpu_custom_call.1} parent=39 // pred_check_branch
          %287 = sbr.rel (%p285) target = $region48
        $region47: #{tpu_custom_call.1} parent=39 // pred_region
          %p288 = scmp.lt.s32.totalorder %s25, 1
          %s289 = scalar_select %p288, %s25, 1
          %p290 = scmp.lt.s32.totalorder %s26, 0
          %s291 = scalar_select %p290, %s26, 0
          %s292 = sadd.s32 %s291, %s289
          %s293 = smul.addr %s292, 8
          %s294 = scalar_lea.vmem %s1, %s293
        $region48: #{tpu_custom_call.1} parent=39 // pred_fallthru
          _
      $region40: #{tpu_custom_call.1} parent=5 // pred_fallthru
        _
      %p295 = scmp.le.s32.totalorder 1, %s18
      %p296 = scmp.lt.s32.totalorder %s18, 3
      %p297 = pnand %p295, %p296
      %p298 = pneg %p297
      // Predicated region
      $region49: #{tpu_custom_call.1} parent=5 // pred_check
        _
      $region50: #{tpu_custom_call.1} parent=5 // pred_check_branch
        %300 = sbr.rel (%p297) target = $region52
      $region51: #{tpu_custom_call.1} parent=5 // pred_region
        %s301 = ssub.s32 %s18, 1
        %p302 = scmp.lt.s32.totalorder %s27, 1
        %s303 = scalar_select %p302, %s27, 1
        %p304 = scmp.lt.s32.totalorder %s28, 0
        %s305 = scalar_select %p304, %s28, 0
        %s306 = sadd.s32 %s305, %s303
        %s307 = smul.addr %s306, 8
        %s308 = scalar_lea.vmem %s0, %s307
        %p309 = pneg %p58
        %p310 = pneg %p55
        %p311 = scmp.lt.s32.totalorder %s27, 1
        %s312 = scalar_select %p311, %s27, 1
        %p313 = scmp.lt.s32.totalorder %s28, 0
        %s314 = scalar_select %p313, %s28, 0
        %s315 = sadd.s32 %s314, %s312
        %s316 = smul.addr %s315, 8
        %s317 = scalar_lea.vmem %s1, %s316
        %p318 = pneg %p86
        %p319 = pneg %p83
        %p320 = pneg %p107
        %p321 = pneg %p104
        %p322 = pneg %p128
        %p323 = pneg %p125
        %p324 = pneg %p149
        %p325 = pneg %p146
        %p326 = pneg %p170
        %p327 = pneg %p167
        %p328 = pneg %p191
        %p329 = pneg %p188
        %p330 = pneg %p212
        %p331 = pneg %p209
        %p332 = pneg %p238
        %p333 = pneg %p235
        %s334 = sand.u32 %s225, 1
        %s335 = scalar_lea.sflag [#allocation7], %s334
        %s336 = sand.u32 %s225, 1
        %s337 = scalar_lea.vmem [#allocation6], %s336
        %p338 = scmp.lt.s32.totalorder %s27, 1
        %s339 = scalar_select %p338, %s27, 1
        %p340 = scmp.lt.s32.totalorder %s28, 0
        %s341 = scalar_select %p340, %s28, 0
        %s342 = sadd.s32 %s341, %s339
        %s343 = smul.addr %s342, 8
        %s344 = scalar_lea.vmem %s0, %s343
        %p345 = scmp.lt.s32.totalorder %s27, 1
        %s346 = scalar_select %p345, %s27, 1
        %p347 = scmp.lt.s32.totalorder %s28, 0
        %s348 = scalar_select %p347, %s28, 0
        %s349 = sadd.s32 %s348, %s346
        %s350 = smul.addr %s349, 8
        %s351 = scalar_lea.vmem %s1, %s350
        %p352 = scmp.eq.s32.totalorder %s28, 0
        // Predicated region
        $region53: #{tpu_custom_call.1} parent=51 // pred_check
          %p353 = pneg %p352
        $region54: #{tpu_custom_call.1} parent=51 // pred_check_branch
          %355 = sbr.rel (%p353) target = $region56
        $region55: #{tpu_custom_call.1} parent=51 // pred_region
          %vm356 = vcmask 0
          %357 = vst.msk [vmem:[#allocation2] sm:$0x1] %vm356, -inf
          %358 = vst.msk [vmem:[#allocation3] sm:$0x1] %vm356, 0.0
          %vm359 = vcmask 253952
          %360 = vst.msk [vmem:[#allocation4] sm:$0x1] %vm359, 0.0
        $region56: #{tpu_custom_call.1} parent=51 // pred_fallthru
          _
        %v361 = vld [vmem:[%s344] sm:$0xff]
        %v362 = vld [vmem:[%s2] sm:$0xff]
        %v363 = vld [vmem:[%s2 + $0x8] sm:$0xff]
        %v364 = vld [vmem:[%s2 + $0x10] sm:$0xff]
        %v365 = vld [vmem:[%s2 + $0x18] sm:$0xff]
        %v366 = vld [vmem:[%s3] sm:$0x1]
        %v368 = vlaneseq
        %v369 = vshrl.u32 %v368, 7
        %v370 = vsub.s32 0, %v369
        %v371 = vrot.slane %v366, %v370
        %vm373 = vcmask 261120
        %v375 = vsel %vm373, %v361, 0
        %377 = vmatprep.subr.mxu0 0.0
        %v378 = vand.u32 %v362, 4294901760
        %379 = vmatpush1.msra.mxu0 %v378
        %380 = vmatprep.subr.mxu0 0.0
        %v381 = vand.u32 %v363, 4294901760
        %382 = vmatpush1.msra.mxu0 %v381
        %383 = vmatprep.subr.mxu0 0.0
        %v384 = vand.u32 %v364, 4294901760
        %385 = vmatpush1.msra.mxu0 %v384
        %386 = vmatprep.subr.mxu0 0.0
        %v387 = vand.u32 %v365, 4294901760
        %388 = vmatpush1.msra.mxu0 %v387
        %389 = vmatprep.subr.mxu0 0.0
        %390 = vmatpush1.msra.mxu0 0.0
        %391 = vmatprep.subr.mxu0 0.0
        %392 = vmatpush1.msra.mxu0 0.0
        %393 = vmatprep.subr.mxu0 0.0
        %394 = vmatpush1.msra.mxu0 0.0
        %395 = vmatprep.subr.mxu0 0.0
        %396 = vmatpush1.msra.mxu0 0.0
        %397 = vmatprep.subr.mxu0 0.0
        %398 = vmatpush1.msra.mxu0 0.0
        %399 = vmatprep.subr.mxu0 0.0
        %400 = vmatpush1.msra.mxu0 0.0
        %401 = vmatprep.subr.mxu0 0.0
        %402 = vmatpush1.msra.mxu0 0.0
        %403 = vmatprep.subr.mxu0 0.0
        %404 = vmatpush1.msra.mxu0 0.0
        %405 = vmatprep.subr.mxu0 0.0
        %406 = vmatpush1.msra.mxu0 0.0
        %407 = vmatprep.subr.mxu0 0.0
        %408 = vmatpush1.msra.mxu0 0.0
        %409 = vmatprep.subr.mxu0 0.0
        %410 = vmatpush1.msra.mxu0 0.0
        %411 = vmatprep.subr.mxu0 0.0
        %412 = vmatpush1.msra.mxu0 0.0
        %413 = vmatprep.subr.mxu0 0.0
        %414 = vmatpush1.msra.mxu0 0.0
        %415 = vmatprep.subr.mxu0 0.0
        %416 = vmatpush1.msra.mxu0 0.0
        %417 = vmatprep.subr.mxu0 0.0
        %418 = vmatpush1.msra.mxu0 0.0
        %419 = vmatprep.subr.mxu0 0.0
        %420 = vmatpush1.msra.mxu0 0.0
        %421 = vmatprep.subr.mxu0 0.0
        %422 = vmatpush1.msra.mxu0 0.0
        %423 = vmatprep.subr.mxu0 0.0
        %424 = vmatpush1.msra.mxu0 0.0
        %425 = vmatprep.subr.mxu0 0.0
        %426 = vmatpush1.msra.mxu0 0.0
        %427 = vmatprep.subr.mxu0 0.0
        %428 = vmatpush1.msra.mxu0 0.0
        %429 = vmatprep.subr.mxu0 0.0
        %430 = vmatpush1.msra.mxu0 0.0
        %431 = vmatprep.subr.mxu0 0.0
        %432 = vmatpush1.msra.mxu0 0.0
        %433 = vmatprep.subr.mxu0 0.0
        %434 = vmatpush1.msra.mxu0 0.0
        %435 = vmatprep.subr.mxu0 0.0
        %436 = vmatpush1.msra.mxu0 0.0
        %437 = vmatprep.subr.mxu0 0.0
        %438 = vmatpush1.msra.mxu0 0.0
        %439 = vmatprep.subr.mxu0 0.0
        %440 = vmatpush1.msra.mxu0 0.0
        %441 = vmatprep.subr.mxu0 0.0
        %442 = vmatpush1.msra.mxu0 0.0
        %443 = vmatprep.subr.mxu0 0.0
        %444 = vmatpush1.msra.mxu0 0.0
        %445 = vmatprep.mubr.f32.mxu0 0.0
        %v446 = vand.u32 %v375, 4294901760
        %v447 = vsub.f32 %v375, %v446
        %v448 = vand.u32 %v447, 4294901760
        %v449 = vsub.f32 %v447, %v448
        %v450 = vand.u32 %v449, 4294901760
        %451 = vmatmul.mubr.f32.gmra.mrb[0].mxu0 %v450
        %v452 = vpop.f32.mrb[0].mxu0
        %v453 = vadd.f32 %v371, %v452
        %v454 = vpop.f32.mrb[0].mxu0
        %455 = vdwg.mxu0
        %456 = vmatprep.subr.mxu0 0.0
        %v457 = vand.u32 %v362, 4294901760
        %v458 = vsub.f32 %v362, %v457
        %v459 = vand.u32 %v458, 4294901760
        %v460 = vsub.f32 %v458, %v459
        %v461 = vand.u32 %v460, 4294901760
        %462 = vmatpush1.msra.mxu0 %v461
        %463 = vmatprep.subr.mxu0 0.0
        %v464 = vand.u32 %v363, 4294901760
        %v465 = vsub.f32 %v363, %v464
        %v466 = vand.u32 %v465, 4294901760
        %v467 = vsub.f32 %v465, %v466
        %v468 = vand.u32 %v467, 4294901760
        %469 = vmatpush1.msra.mxu0 %v468
        %470 = vmatprep.subr.mxu0 0.0
        %v471 = vand.u32 %v364, 4294901760
        %v472 = vsub.f32 %v364, %v471
        %v473 = vand.u32 %v472, 4294901760
        %v474 = vsub.f32 %v472, %v473
        %v475 = vand.u32 %v474, 4294901760
        %476 = vmatpush1.msra.mxu0 %v475
        %477 = vmatprep.subr.mxu0 0.0
        %v478 = vand.u32 %v365, 4294901760
        %v479 = vsub.f32 %v365, %v478
        %v480 = vand.u32 %v479, 4294901760
        %v481 = vsub.f32 %v479, %v480
        %v482 = vand.u32 %v481, 4294901760
        %483 = vmatpush1.msra.mxu0 %v482
        %484 = vmatprep.subr.mxu0 0.0
        %485 = vmatpush1.msra.mxu0 0.0
        %486 = vmatprep.subr.mxu0 0.0
        %487 = vmatpush1.msra.mxu0 0.0
        %488 = vmatprep.subr.mxu0 0.0
        %489 = vmatpush1.msra.mxu0 0.0
        %490 = vmatprep.subr.mxu0 0.0
        %491 = vmatpush1.msra.mxu0 0.0
        %492 = vmatprep.subr.mxu0 0.0
        %493 = vmatpush1.msra.mxu0 0.0
        %494 = vmatprep.subr.mxu0 0.0
        %495 = vmatpush1.msra.mxu0 0.0
        %496 = vmatprep.subr.mxu0 0.0
        %497 = vmatpush1.msra.mxu0 0.0
        %498 = vmatprep.subr.mxu0 0.0
        %499 = vmatpush1.msra.mxu0 0.0
        %500 = vmatprep.subr.mxu0 0.0
        %501 = vmatpush1.msra.mxu0 0.0
        %502 = vmatprep.subr.mxu0 0.0
        %503 = vmatpush1.msra.mxu0 0.0
        %504 = vmatprep.subr.mxu0 0.0
        %505 = vmatpush1.msra.mxu0 0.0
        %506 = vmatprep.subr.mxu0 0.0
        %507 = vmatpush1.msra.mxu0 0.0
        %508 = vmatprep.subr.mxu0 0.0
        %509 = vmatpush1.msra.mxu0 0.0
        %510 = vmatprep.subr.mxu0 0.0
        %511 = vmatpush1.msra.mxu0 0.0
        %512 = vmatprep.subr.mxu0 0.0
        %513 = vmatpush1.msra.mxu0 0.0
        %514 = vmatprep.subr.mxu0 0.0
        %515 = vmatpush1.msra.mxu0 0.0
        %516 = vmatprep.subr.mxu0 0.0
        %517 = vmatpush1.msra.mxu0 0.0
        %518 = vmatprep.subr.mxu0 0.0
        %519 = vmatpush1.msra.mxu0 0.0
        %520 = vmatprep.subr.mxu0 0.0
        %521 = vmatpush1.msra.mxu0 0.0
        %522 = vmatprep.subr.mxu0 0.0
        %523 = vmatpush1.msra.mxu0 0.0
        %524 = vmatprep.subr.mxu0 0.0
        %525 = vmatpush1.msra.mxu0 0.0
        %526 = vmatprep.subr.mxu0 0.0
        %527 = vmatpush1.msra.mxu0 0.0
        %528 = vmatprep.subr.mxu0 0.0
        %529 = vmatpush1.msra.mxu0 0.0
        %530 = vmatprep.subr.mxu0 0.0
        %531 = vmatpush1.msra.mxu0 0.0
        %532 = vmatprep.subr.mxu0 0.0
        %533 = vmatpush1.msra.mxu0 0.0
        %534 = vmatprep.subr.mxu0 0.0
        %535 = vmatpush1.msra.mxu0 0.0
        %536 = vmatprep.subr.mxu0 0.0
        %537 = vmatpush1.msra.mxu0 0.0
        %538 = vmatprep.subr.mxu0 0.0
        %539 = vmatpush1.msra.mxu0 0.0
        %540 = vmatprep.mubr.f32.mxu0 0.0
        %v541 = vand.u32 %v375, 4294901760
        %542 = vmatmul.mubr.f32.gmra.mrb[0].mxu0 %v541
        %v543 = vpop.f32.mrb[0].mxu0
        %v544 = vadd.f32 %v453, %v543
        %v545 = vpop.f32.mrb[0].mxu0
        %546 = vdwg.mxu0
        %547 = vmatprep.subr.mxu0 0.0
        %v548 = vand.u32 %v362, 4294901760
        %v549 = vsub.f32 %v362, %v548
        %550 = vmatpush1.msra.mxu0 %v549
        %551 = vmatprep.subr.mxu0 0.0
        %v552 = vand.u32 %v363, 4294901760
        %v553 = vsub.f32 %v363, %v552
        %554 = vmatpush1.msra.mxu0 %v553
        %555 = vmatprep.subr.mxu0 0.0
        %v556 = vand.u32 %v364, 4294901760
        %v557 = vsub.f32 %v364, %v556
        %558 = vmatpush1.msra.mxu0 %v557
        %559 = vmatprep.subr.mxu0 0.0
        %v560 = vand.u32 %v365, 4294901760
        %v561 = vsub.f32 %v365, %v560
        %562 = vmatpush1.msra.mxu0 %v561
        %563 = vmatprep.subr.mxu0 0.0
        %564 = vmatpush1.msra.mxu0 0.0
        %565 = vmatprep.subr.mxu0 0.0
        %566 = vmatpush1.msra.mxu0 0.0
        %567 = vmatprep.subr.mxu0 0.0
        %568 = vmatpush1.msra.mxu0 0.0
        %569 = vmatprep.subr.mxu0 0.0
        %570 = vmatpush1.msra.mxu0 0.0
        %571 = vmatprep.subr.mxu0 0.0
        %572 = vmatpush1.msra.mxu0 0.0
        %573 = vmatprep.subr.mxu0 0.0
        %574 = vmatpush1.msra.mxu0 0.0
        %575 = vmatprep.subr.mxu0 0.0
        %576 = vmatpush1.msra.mxu0 0.0
        %577 = vmatprep.subr.mxu0 0.0
        %578 = vmatpush1.msra.mxu0 0.0
        %579 = vmatprep.subr.mxu0 0.0
        %580 = vmatpush1.msra.mxu0 0.0
        %581 = vmatprep.subr.mxu0 0.0
        %582 = vmatpush1.msra.mxu0 0.0
        %583 = vmatprep.subr.mxu0 0.0
        %584 = vmatpush1.msra.mxu0 0.0
        %585 = vmatprep.subr.mxu0 0.0
        %586 = vmatpush1.msra.mxu0 0.0
        %587 = vmatprep.subr.mxu0 0.0
        %588 = vmatpush1.msra.mxu0 0.0
        %589 = vmatprep.subr.mxu0 0.0
        %590 = vmatpush1.msra.mxu0 0.0
        %591 = vmatprep.subr.mxu0 0.0
        %592 = vmatpush1.msra.mxu0 0.0
        %593 = vmatprep.subr.mxu0 0.0
        %594 = vmatpush1.msra.mxu0 0.0
        %595 = vmatprep.subr.mxu0 0.0
        %596 = vmatpush1.msra.mxu0 0.0
        %597 = vmatprep.subr.mxu0 0.0
        %598 = vmatpush1.msra.mxu0 0.0
        %599 = vmatprep.subr.mxu0 0.0
        %600 = vmatpush1.msra.mxu0 0.0
        %601 = vmatprep.subr.mxu0 0.0
        %602 = vmatpush1.msra.mxu0 0.0
        %603 = vmatprep.subr.mxu0 0.0
        %604 = vmatpush1.msra.mxu0 0.0
        %605 = vmatprep.subr.mxu0 0.0
        %606 = vmatpush1.msra.mxu0 0.0
        %607 = vmatprep.subr.mxu0 0.0
        %608 = vmatpush1.msra.mxu0 0.0
        %609 = vmatprep.subr.mxu0 0.0
        %610 = vmatpush1.msra.mxu0 0.0
        %611 = vmatprep.subr.mxu0 0.0
        %612 = vmatpush1.msra.mxu0 0.0
        %613 = vmatprep.subr.mxu0 0.0
        %614 = vmatpush1.msra.mxu0 0.0
        %615 = vmatprep.subr.mxu0 0.0
        %616 = vmatpush1.msra.mxu0 0.0
        %617 = vmatprep.subr.mxu0 0.0
        %618 = vmatpush1.msra.mxu0 0.0
        %619 = vmatprep.mubr.f32.mxu0 0.0
        %v620 = vand.u32 %v375, 4294901760
        %v621 = vsub.f32 %v375, %v620
        %622 = vmatmul.mubr.f32.gmra.mrb[0].mxu0 %v621
        %v623 = vpop.f32.mrb[0].mxu0
        %v624 = vadd.f32 %v544, %v623
        %v625 = vpop.f32.mrb[0].mxu0
        %626 = vdwg.mxu0
        %627 = vmatprep.subr.mxu0 0.0
        %v628 = vand.u32 %v362, 4294901760
        %629 = vmatpush1.msra.mxu0 %v628
        %630 = vmatprep.subr.mxu0 0.0
        %v631 = vand.u32 %v363, 4294901760
        %632 = vmatpush1.msra.mxu0 %v631
        %633 = vmatprep.subr.mxu0 0.0
        %v634 = vand.u32 %v364, 4294901760
        %635 = vmatpush1.msra.mxu0 %v634
        %636 = vmatprep.subr.mxu0 0.0
        %v637 = vand.u32 %v365, 4294901760
        %638 = vmatpush1.msra.mxu0 %v637
        %639 = vmatprep.subr.mxu0 0.0
        %640 = vmatpush1.msra.mxu0 0.0
        %641 = vmatprep.subr.mxu0 0.0
        %642 = vmatpush1.msra.mxu0 0.0
        %643 = vmatprep.subr.mxu0 0.0
        %644 = vmatpush1.msra.mxu0 0.0
        %645 = vmatprep.subr.mxu0 0.0
        %646 = vmatpush1.msra.mxu0 0.0
        %647 = vmatprep.subr.mxu0 0.0
        %648 = vmatpush1.msra.mxu0 0.0
        %649 = vmatprep.subr.mxu0 0.0
        %650 = vmatpush1.msra.mxu0 0.0
        %651 = vmatprep.subr.mxu0 0.0
        %652 = vmatpush1.msra.mxu0 0.0
        %653 = vmatprep.subr.mxu0 0.0
        %654 = vmatpush1.msra.mxu0 0.0
        %655 = vmatprep.subr.mxu0 0.0
        %656 = vmatpush1.msra.mxu0 0.0
        %657 = vmatprep.subr.mxu0 0.0
        %658 = vmatpush1.msra.mxu0 0.0
        %659 = vmatprep.subr.mxu0 0.0
        %660 = vmatpush1.msra.mxu0 0.0
        %661 = vmatprep.subr.mxu0 0.0
        %662 = vmatpush1.msra.mxu0 0.0
        %663 = vmatprep.subr.mxu0 0.0
        %664 = vmatpush1.msra.mxu0 0.0
        %665 = vmatprep.subr.mxu0 0.0
        %666 = vmatpush1.msra.mxu0 0.0
        %667 = vmatprep.subr.mxu0 0.0
        %668 = vmatpush1.msra.mxu0 0.0
        %669 = vmatprep.subr.mxu0 0.0
        %670 = vmatpush1.msra.mxu0 0.0
        %671 = vmatprep.subr.mxu0 0.0
        %672 = vmatpush1.msra.mxu0 0.0
        %673 = vmatprep.subr.mxu0 0.0
        %674 = vmatpush1.msra.mxu0 0.0
        %675 = vmatprep.subr.mxu0 0.0
        %676 = vmatpush1.msra.mxu0 0.0
        %677 = vmatprep.subr.mxu0 0.0
        %678 = vmatpush1.msra.mxu0 0.0
        %679 = vmatprep.subr.mxu0 0.0
        %680 = vmatpush1.msra.mxu0 0.0
        %681 = vmatprep.subr.mxu0 0.0
        %682 = vmatpush1.msra.mxu0 0.0
        %683 = vmatprep.subr.mxu0 0.0
        %684 = vmatpush1.msra.mxu0 0.0
        %685 = vmatprep.subr.mxu0 0.0
        %686 = vmatpush1.msra.mxu0 0.0
        %687 = vmatprep.subr.mxu0 0.0
        %688 = vmatpush1.msra.mxu0 0.0
        %689 = vmatprep.subr.mxu0 0.0
        %690 = vmatpush1.msra.mxu0 0.0
        %691 = vmatprep.subr.mxu0 0.0
        %692 = vmatpush1.msra.mxu0 0.0
        %693 = vmatprep.subr.mxu0 0.0
        %694 = vmatpush1.msra.mxu0 0.0
        %695 = vmatprep.mubr.f32.mxu0 0.0
        %v696 = vand.u32 %v375, 4294901760
        %v697 = vsub.f32 %v375, %v696
        %v698 = vand.u32 %v697, 4294901760
        %699 = vmatmul.mubr.f32.gmra.mrb[0].mxu0 %v698
        %v700 = vpop.f32.mrb[0].mxu0
        %v701 = vadd.f32 %v624, %v700
        %v702 = vpop.f32.mrb[0].mxu0
        %703 = vdwg.mxu0
        %704 = vmatprep.subr.mxu0 0.0
        %v705 = vand.u32 %v362, 4294901760
        %v706 = vsub.f32 %v362, %v705
        %v707 = vand.u32 %v706, 4294901760
        %708 = vmatpush1.msra.mxu0 %v707
        %709 = vmatprep.subr.mxu0 0.0
        %v710 = vand.u32 %v363, 4294901760
        %v711 = vsub.f32 %v363, %v710
        %v712 = vand.u32 %v711, 4294901760
        %713 = vmatpush1.msra.mxu0 %v712
        %714 = vmatprep.subr.mxu0 0.0
        %v715 = vand.u32 %v364, 4294901760
        %v716 = vsub.f32 %v364, %v715
        %v717 = vand.u32 %v716, 4294901760
        %718 = vmatpush1.msra.mxu0 %v717
        %719 = vmatprep.subr.mxu0 0.0
        %v720 = vand.u32 %v365, 4294901760
        %v721 = vsub.f32 %v365, %v720
        %v722 = vand.u32 %v721, 4294901760
        %723 = vmatpush1.msra.mxu0 %v722
        %724 = vmatprep.subr.mxu0 0.0
        %725 = vmatpush1.msra.mxu0 0.0
        %726 = vmatprep.subr.mxu0 0.0
        %727 = vmatpush1.msra.mxu0 0.0
        %728 = vmatprep.subr.mxu0 0.0
        %729 = vmatpush1.msra.mxu0 0.0
        %730 = vmatprep.subr.mxu0 0.0
        %731 = vmatpush1.msra.mxu0 0.0
        %732 = vmatprep.subr.mxu0 0.0
        %733 = vmatpush1.msra.mxu0 0.0
        %734 = vmatprep.subr.mxu0 0.0
        %735 = vmatpush1.msra.mxu0 0.0
        %736 = vmatprep.subr.mxu0 0.0
        %737 = vmatpush1.msra.mxu0 0.0
        %738 = vmatprep.subr.mxu0 0.0
        %739 = vmatpush1.msra.mxu0 0.0
        %740 = vmatprep.subr.mxu0 0.0
        %741 = vmatpush1.msra.mxu0 0.0
        %742 = vmatprep.subr.mxu0 0.0
        %743 = vmatpush1.msra.mxu0 0.0
        %744 = vmatprep.subr.mxu0 0.0
        %745 = vmatpush1.msra.mxu0 0.0
        %746 = vmatprep.subr.mxu0 0.0
        %747 = vmatpush1.msra.mxu0 0.0
        %748 = vmatprep.subr.mxu0 0.0
        %749 = vmatpush1.msra.mxu0 0.0
        %750 = vmatprep.subr.mxu0 0.0
        %751 = vmatpush1.msra.mxu0 0.0
        %752 = vmatprep.subr.mxu0 0.0
        %753 = vmatpush1.msra.mxu0 0.0
        %754 = vmatprep.subr.mxu0 0.0
        %755 = vmatpush1.msra.mxu0 0.0
        %756 = vmatprep.subr.mxu0 0.0
        %757 = vmatpush1.msra.mxu0 0.0
        %758 = vmatprep.subr.mxu0 0.0
        %759 = vmatpush1.msra.mxu0 0.0
        %760 = vmatprep.subr.mxu0 0.0
        %761 = vmatpush1.msra.mxu0 0.0
        %762 = vmatprep.subr.mxu0 0.0
        %763 = vmatpush1.msra.mxu0 0.0
        %764 = vmatprep.subr.mxu0 0.0
        %765 = vmatpush1.msra.mxu0 0.0
        %766 = vmatprep.subr.mxu0 0.0
        %767 = vmatpush1.msra.mxu0 0.0
        %768 = vmatprep.subr.mxu0 0.0
        %769 = vmatpush1.msra.mxu0 0.0
        %770 = vmatprep.subr.mxu0 0.0
        %771 = vmatpush1.msra.mxu0 0.0
        %772 = vmatprep.subr.mxu0 0.0
        %773 = vmatpush1.msra.mxu0 0.0
        %774 = vmatprep.subr.mxu0 0.0
        %775 = vmatpush1.msra.mxu0 0.0
        %776 = vmatprep.subr.mxu0 0.0
        %777 = vmatpush1.msra.mxu0 0.0
        %778 = vmatprep.subr.mxu0 0.0
        %779 = vmatpush1.msra.mxu0 0.0
        %780 = vmatprep.mubr.f32.mxu0 0.0
        %v781 = vand.u32 %v375, 4294901760
        %782 = vmatmul.mubr.f32.gmra.mrb[0].mxu0 %v781
        %v783 = vpop.f32.mrb[0].mxu0
        %v784 = vadd.f32 %v701, %v783
        %v785 = vpop.f32.mrb[0].mxu0
        %786 = vdwg.mxu0
        %787 = vmatprep.subr.mxu0 0.0
        %v788 = vand.u32 %v362, 4294901760
        %789 = vmatpush1.msra.mxu0 %v788
        %790 = vmatprep.subr.mxu0 0.0
        %v791 = vand.u32 %v363, 4294901760
        %792 = vmatpush1.msra.mxu0 %v791
        %793 = vmatprep.subr.mxu0 0.0
        %v794 = vand.u32 %v364, 4294901760
        %795 = vmatpush1.msra.mxu0 %v794
        %796 = vmatprep.subr.mxu0 0.0
        %v797 = vand.u32 %v365, 4294901760
        %798 = vmatpush1.msra.mxu0 %v797
        %799 = vmatprep.subr.mxu0 0.0
        %800 = vmatpush1.msra.mxu0 0.0
        %801 = vmatprep.subr.mxu0 0.0
        %802 = vmatpush1.msra.mxu0 0.0
        %803 = vmatprep.subr.mxu0 0.0
        %804 = vmatpush1.msra.mxu0 0.0
        %805 = vmatprep.subr.mxu0 0.0
        %806 = vmatpush1.msra.mxu0 0.0
        %807 = vmatprep.subr.mxu0 0.0
        %808 = vmatpush1.msra.mxu0 0.0
        %809 = vmatprep.subr.mxu0 0.0
        %810 = vmatpush1.msra.mxu0 0.0
        %811 = vmatprep.subr.mxu0 0.0
        %812 = vmatpush1.msra.mxu0 0.0
        %813 = vmatprep.subr.mxu0 0.0
        %814 = vmatpush1.msra.mxu0 0.0
        %815 = vmatprep.subr.mxu0 0.0
        %816 = vmatpush1.msra.mxu0 0.0
        %817 = vmatprep.subr.mxu0 0.0
        %818 = vmatpush1.msra.mxu0 0.0
        %819 = vmatprep.subr.mxu0 0.0
        %820 = vmatpush1.msra.mxu0 0.0
        %821 = vmatprep.subr.mxu0 0.0
        %822 = vmatpush1.msra.mxu0 0.0
        %823 = vmatprep.subr.mxu0 0.0
        %824 = vmatpush1.msra.mxu0 0.0
        %825 = vmatprep.subr.mxu0 0.0
        %826 = vmatpush1.msra.mxu0 0.0
        %827 = vmatprep.subr.mxu0 0.0
        %828 = vmatpush1.msra.mxu0 0.0
        %829 = vmatprep.subr.mxu0 0.0
        %830 = vmatpush1.msra.mxu0 0.0
        %831 = vmatprep.subr.mxu0 0.0
        %832 = vmatpush1.msra.mxu0 0.0
        %833 = vmatprep.subr.mxu0 0.0
        %834 = vmatpush1.msra.mxu0 0.0
        %835 = vmatprep.subr.mxu0 0.0
        %836 = vmatpush1.msra.mxu0 0.0
        %837 = vmatprep.subr.mxu0 0.0
        %838 = vmatpush1.msra.mxu0 0.0
        %839 = vmatprep.subr.mxu0 0.0
        %840 = vmatpush1.msra.mxu0 0.0
        %841 = vmatprep.subr.mxu0 0.0
        %842 = vmatpush1.msra.mxu0 0.0
        %843 = vmatprep.subr.mxu0 0.0
        %844 = vmatpush1.msra.mxu0 0.0
        %845 = vmatprep.subr.mxu0 0.0
        %846 = vmatpush1.msra.mxu0 0.0
        %847 = vmatprep.subr.mxu0 0.0
        %848 = vmatpush1.msra.mxu0 0.0
        %849 = vmatprep.subr.mxu0 0.0
        %850 = vmatpush1.msra.mxu0 0.0
        %851 = vmatprep.subr.mxu0 0.0
        %852 = vmatpush1.msra.mxu0 0.0
        %853 = vmatprep.subr.mxu0 0.0
        %854 = vmatpush1.msra.mxu0 0.0
        %855 = vmatprep.mubr.f32.mxu0 0.0
        %v856 = vand.u32 %v375, 4294901760
        %857 = vmatmul.mubr.f32.gmra.mrb[0].mxu0 %v856
        %v858 = vpop.f32.mrb[0].mxu0
        %v859 = vadd.f32 %v784, %v858
        %v860 = vpop.f32.mrb[0].mxu0
        %861 = vdwg.mxu0
        %v862 = vsel %vm373, %v859, 0.0
        %863 = vadd.xlane.f32.xlu0 %v862
        %v864 = vpop.xlane.xlu0 %863
        %v865 = vrcp.pop 32.0
        %v866 = vmul.f32 %v864, %v865
        %v867 = vsub.f32 %v859, %v866
        %v868 = vmul.f32 %v867, %v867
        %v869 = vsel %vm373, %v868, 0.0
        %870 = vadd.xlane.f32.xlu0 %v869
        %v871 = vpop.xlane.xlu0 %870
        %v872 = vmul.f32 %v871, %v865
        %v873 = vadd.f32 %v872, 1e-05
        %v874 = vrsqrt.pop %v873
        %v875 = vmul.f32 %v867, %v874
        %v876 = vld [vmem:[%s4] sm:$0x1]
        %v878 = vlaneseq
        %v879 = vshrl.u32 %v878, 7
        %v880 = vsub.s32 0, %v879
        %v881 = vrot.slane %v876, %v880
        %v883 = vmul.f32 %v875, %v881
        %v884 = vld [vmem:[%s5] sm:$0x1]
        %v886 = vlaneseq
        %v887 = vshrl.u32 %v886, 7
        %v888 = vsub.s32 0, %v887
        %v889 = vrot.slane %v884, %v888
        %v891 = vadd.f32 %v883, %v889
        %v892 = vmul.f32 %v891, 0.5
        %v893 = vmul.f32 %v891, 0.70710677
        %v894 = vand.u32 2147483647, %v893
        %v895 = vmul.f32 %v894, 0.3275911
        %v896 = vadd.f32 %v895, 1.0
        %v897 = vrcp.pop %v896
        %v898 = vmul.f32 1.0, %v897
        %v899 = vmul.f32 %v898, 1.0614054
        %v900 = vadd.f32 %v899, -1.4531521
        %v901 = vmul.f32 %v900, %v898
        %v902 = vadd.f32 %v901, 1.4214138
        %v903 = vmul.f32 %v902, %v898
        %v904 = vadd.f32 %v903, -0.28449672
        %v905 = vmul.f32 %v904, %v898
        %v906 = vadd.f32 %v905, 0.2548296
        %v907 = vmul.f32 %v906, %v898
        %v908 = vmul.f32 %v894, %v894
        %v909 = vsub.f32 0.0, %v908
        %v910 = vmul.f32 %v909, 1.442695
        %v911 = vpow.pop %v910
        %v912 = vmul.f32 %v907, %v911
        %v913 = vsub.f32 1.0, %v912
        %vm914 = vcmp.lt.f32.partialorder %v893, 0.0
        %v915 = vsub.f32 0.0, %v913
        %v916 = vsel %vm914, %v915, %v913
        %v917 = vadd.f32 %v916, 1.0
        %v918 = vmul.f32 %v892, %v917
        %v919 = vld [vmem:[%s6] sm:$0xff]
        %v920 = vld [vmem:[%s6 + $0x8] sm:$0xff]
        %v921 = vld [vmem:[%s6 + $0x10] sm:$0xff]
        %v922 = vld [vmem:[%s6 + $0x18] sm:$0xff]
        %s923 = sld [smem:[#allocation5]]
        %v924 = vstv %s923
        %v926 = vsel %vm373, %v918, 0
        %928 = vmatprep.subr.mxu0 0.0
        %v929 = vand.u32 %v919, 4294901760
        %930 = vmatpush1.msra.mxu0 %v929
        %931 = vmatprep.subr.mxu0 0.0
        %v932 = vand.u32 %v920, 4294901760
        %933 = vmatpush1.msra.mxu0 %v932
        %934 = vmatprep.subr.mxu0 0.0
        %v935 = vand.u32 %v921, 4294901760
        %936 = vmatpush1.msra.mxu0 %v935
        %937 = vmatprep.subr.mxu0 0.0
        %v938 = vand.u32 %v922, 4294901760
        %939 = vmatpush1.msra.mxu0 %v938
        %940 = vmatprep.subr.mxu0 0.0
        %941 = vmatpush1.msra.mxu0 0.0
        %942 = vmatprep.subr.mxu0 0.0
        %943 = vmatpush1.msra.mxu0 0.0
        %944 = vmatprep.subr.mxu0 0.0
        %945 = vmatpush1.msra.mxu0 0.0
        %946 = vmatprep.subr.mxu0 0.0
        %947 = vmatpush1.msra.mxu0 0.0
        %948 = vmatprep.subr.mxu0 0.0
        %949 = vmatpush1.msra.mxu0 0.0
        %950 = vmatprep.subr.mxu0 0.0
        %951 = vmatpush1.msra.mxu0 0.0
        %952 = vmatprep.subr.mxu0 0.0
        %953 = vmatpush1.msra.mxu0 0.0
        %954 = vmatprep.subr.mxu0 0.0
        %955 = vmatpush1.msra.mxu0 0.0
        %956 = vmatprep.subr.mxu0 0.0
        %957 = vmatpush1.msra.mxu0 0.0
        %958 = vmatprep.subr.mxu0 0.0
        %959 = vmatpush1.msra.mxu0 0.0
        %960 = vmatprep.subr.mxu0 0.0
        %961 = vmatpush1.msra.mxu0 0.0
        %962 = vmatprep.subr.mxu0 0.0
        %963 = vmatpush1.msra.mxu0 0.0
        %964 = vmatprep.subr.mxu0 0.0
        %965 = vmatpush1.msra.mxu0 0.0
        %966 = vmatprep.subr.mxu0 0.0
        %967 = vmatpush1.msra.mxu0 0.0
        %968 = vmatprep.subr.mxu0 0.0
        %969 = vmatpush1.msra.mxu0 0.0
        %970 = vmatprep.subr.mxu0 0.0
        %971 = vmatpush1.msra.mxu0 0.0
        %972 = vmatprep.subr.mxu0 0.0
        %973 = vmatpush1.msra.mxu0 0.0
        %974 = vmatprep.subr.mxu0 0.0
        %975 = vmatpush1.msra.mxu0 0.0
        %976 = vmatprep.subr.mxu0 0.0
        %977 = vmatpush1.msra.mxu0 0.0
        %978 = vmatprep.subr.mxu0 0.0
        %979 = vmatpush1.msra.mxu0 0.0
        %980 = vmatprep.subr.mxu0 0.0
        %981 = vmatpush1.msra.mxu0 0.0
        %982 = vmatprep.subr.mxu0 0.0
        %983 = vmatpush1.msra.mxu0 0.0
        %984 = vmatprep.subr.mxu0 0.0
        %985 = vmatpush1.msra.mxu0 0.0
        %986 = vmatprep.subr.mxu0 0.0
        %987 = vmatpush1.msra.mxu0 0.0
        %988 = vmatprep.subr.mxu0 0.0
        %989 = vmatpush1.msra.mxu0 0.0
        %990 = vmatprep.subr.mxu0 0.0
        %991 = vmatpush1.msra.mxu0 0.0
        %992 = vmatprep.subr.mxu0 0.0
        %993 = vmatpush1.msra.mxu0 0.0
        %994 = vmatprep.subr.mxu0 0.0
        %995 = vmatpush1.msra.mxu0 0.0
        %996 = vmatprep.mubr.f32.mxu0 0.0
        %v997 = vand.u32 %v926, 4294901760
        %v998 = vsub.f32 %v926, %v997
        %v999 = vand.u32 %v998, 4294901760
        %v1000 = vsub.f32 %v998, %v999
        %v1001 = vand.u32 %v1000, 4294901760
        %1002 = vmatmul.mubr.f32.gmra.mrb[0].mxu0 %v1001
        %v1003 = vpop.f32.mrb[0].mxu0
        %v1004 = vadd.f32 %v924, %v1003
        %v1005 = vpop.f32.mrb[0].mxu0
        %1006 = vdwg.mxu0
        %1007 = vmatprep.subr.mxu0 0.0
        %v1008 = vand.u32 %v919, 4294901760
        %v1009 = vsub.f32 %v919, %v1008
        %v1010 = vand.u32 %v1009, 4294901760
        %v1011 = vsub.f32 %v1009, %v1010
        %v1012 = vand.u32 %v1011, 4294901760
        %1013 = vmatpush1.msra.mxu0 %v1012
        %1014 = vmatprep.subr.mxu0 0.0
        %v1015 = vand.u32 %v920, 4294901760
        %v1016 = vsub.f32 %v920, %v1015
        %v1017 = vand.u32 %v1016, 4294901760
        %v1018 = vsub.f32 %v1016, %v1017
        %v1019 = vand.u32 %v1018, 4294901760
        %1020 = vmatpush1.msra.mxu0 %v1019
        %1021 = vmatprep.subr.mxu0 0.0
        %v1022 = vand.u32 %v921, 4294901760
        %v1023 = vsub.f32 %v921, %v1022
        %v1024 = vand.u32 %v1023, 4294901760
        %v1025 = vsub.f32 %v1023, %v1024
        %v1026 = vand.u32 %v1025, 4294901760
        %1027 = vmatpush1.msra.mxu0 %v1026
        %1028 = vmatprep.subr.mxu0 0.0
        %v1029 = vand.u32 %v922, 4294901760
        %v1030 = vsub.f32 %v922, %v1029
        %v1031 = vand.u32 %v1030, 4294901760
        %v1032 = vsub.f32 %v1030, %v1031
        %v1033 = vand.u32 %v1032, 4294901760
        %1034 = vmatpush1.msra.mxu0 %v1033
        %1035 = vmatprep.subr.mxu0 0.0
        %1036 = vmatpush1.msra.mxu0 0.0
        %1037 = vmatprep.subr.mxu0 0.0
        %1038 = vmatpush1.msra.mxu0 0.0
        %1039 = vmatprep.subr.mxu0 0.0
        %1040 = vmatpush1.msra.mxu0 0.0
        %1041 = vmatprep.subr.mxu0 0.0
        %1042 = vmatpush1.msra.mxu0 0.0
        %1043 = vmatprep.subr.mxu0 0.0
        %1044 = vmatpush1.msra.mxu0 0.0
        %1045 = vmatprep.subr.mxu0 0.0
        %1046 = vmatpush1.msra.mxu0 0.0
        %1047 = vmatprep.subr.mxu0 0.0
        %1048 = vmatpush1.msra.mxu0 0.0
        %1049 = vmatprep.subr.mxu0 0.0
        %1050 = vmatpush1.msra.mxu0 0.0
        %1051 = vmatprep.subr.mxu0 0.0
        %1052 = vmatpush1.msra.mxu0 0.0
        %1053 = vmatprep.subr.mxu0 0.0
        %1054 = vmatpush1.msra.mxu0 0.0
        %1055 = vmatprep.subr.mxu0 0.0
        %1056 = vmatpush1.msra.mxu0 0.0
        %1057 = vmatprep.subr.mxu0 0.0
        %1058 = vmatpush1.msra.mxu0 0.0
        %1059 = vmatprep.subr.mxu0 0.0
        %1060 = vmatpush1.msra.mxu0 0.0
        %1061 = vmatprep.subr.mxu0 0.0
        %1062 = vmatpush1.msra.mxu0 0.0
        %1063 = vmatprep.subr.mxu0 0.0
        %1064 = vmatpush1.msra.mxu0 0.0
        %1065 = vmatprep.subr.mxu0 0.0
        %1066 = vmatpush1.msra.mxu0 0.0
        %1067 = vmatprep.subr.mxu0 0.0
        %1068 = vmatpush1.msra.mxu0 0.0
        %1069 = vmatprep.subr.mxu0 0.0
        %1070 = vmatpush1.msra.mxu0 0.0
        %1071 = vmatprep.subr.mxu0 0.0
        %1072 = vmatpush1.msra.mxu0 0.0
        %1073 = vmatprep.subr.mxu0 0.0
        %1074 = vmatpush1.msra.mxu0 0.0
        %1075 = vmatprep.subr.mxu0 0.0
        %1076 = vmatpush1.msra.mxu0 0.0
        %1077 = vmatprep.subr.mxu0 0.0
        %1078 = vmatpush1.msra.mxu0 0.0
        %1079 = vmatprep.subr.mxu0 0.0
        %1080 = vmatpush1.msra.mxu0 0.0
        %1081 = vmatprep.subr.mxu0 0.0
        %1082 = vmatpush1.msra.mxu0 0.0
        %1083 = vmatprep.subr.mxu0 0.0
        %1084 = vmatpush1.msra.mxu0 0.0
        %1085 = vmatprep.subr.mxu0 0.0
        %1086 = vmatpush1.msra.mxu0 0.0
        %1087 = vmatprep.subr.mxu0 0.0
        %1088 = vmatpush1.msra.mxu0 0.0
        %1089 = vmatprep.subr.mxu0 0.0
        %1090 = vmatpush1.msra.mxu0 0.0
        %1091 = vmatprep.mubr.f32.mxu0 0.0
        %v1092 = vand.u32 %v926, 4294901760
        %1093 = vmatmul.mubr.f32.gmra.mrb[0].mxu0 %v1092
        %v1094 = vpop.f32.mrb[0].mxu0
        %v1095 = vadd.f32 %v1004, %v1094
        %v1096 = vpop.f32.mrb[0].mxu0
        %1097 = vdwg.mxu0
        %1098 = vmatprep.subr.mxu0 0.0
        %v1099 = vand.u32 %v919, 4294901760
        %v1100 = vsub.f32 %v919, %v1099
        %1101 = vmatpush1.msra.mxu0 %v1100
        %1102 = vmatprep.subr.mxu0 0.0
        %v1103 = vand.u32 %v920, 4294901760
        %v1104 = vsub.f32 %v920, %v1103
        %1105 = vmatpush1.msra.mxu0 %v1104
        %1106 = vmatprep.subr.mxu0 0.0
        %v1107 = vand.u32 %v921, 4294901760
        %v1108 = vsub.f32 %v921, %v1107
        %1109 = vmatpush1.msra.mxu0 %v1108
        %1110 = vmatprep.subr.mxu0 0.0
        %v1111 = vand.u32 %v922, 4294901760
        %v1112 = vsub.f32 %v922, %v1111
        %1113 = vmatpush1.msra.mxu0 %v1112
        %1114 = vmatprep.subr.mxu0 0.0
        %1115 = vmatpush1.msra.mxu0 0.0
        %1116 = vmatprep.subr.mxu0 0.0
        %1117 = vmatpush1.msra.mxu0 0.0
        %1118 = vmatprep.subr.mxu0 0.0
        %1119 = vmatpush1.msra.mxu0 0.0
        %1120 = vmatprep.subr.mxu0 0.0
        %1121 = vmatpush1.msra.mxu0 0.0
        %1122 = vmatprep.subr.mxu0 0.0
        %1123 = vmatpush1.msra.mxu0 0.0
        %1124 = vmatprep.subr.mxu0 0.0
        %1125 = vmatpush1.msra.mxu0 0.0
        %1126 = vmatprep.subr.mxu0 0.0
        %1127 = vmatpush1.msra.mxu0 0.0
        %1128 = vmatprep.subr.mxu0 0.0
        %1129 = vmatpush1.msra.mxu0 0.0
        %1130 = vmatprep.subr.mxu0 0.0
        %1131 = vmatpush1.msra.mxu0 0.0
        %1132 = vmatprep.subr.mxu0 0.0
        %1133 = vmatpush1.msra.mxu0 0.0
        %1134 = vmatprep.subr.mxu0 0.0
        %1135 = vmatpush1.msra.mxu0 0.0
        %1136 = vmatprep.subr.mxu0 0.0
        %1137 = vmatpush1.msra.mxu0 0.0
        %1138 = vmatprep.subr.mxu0 0.0
        %1139 = vmatpush1.msra.mxu0 0.0
        %1140 = vmatprep.subr.mxu0 0.0
        %1141 = vmatpush1.msra.mxu0 0.0
        %1142 = vmatprep.subr.mxu0 0.0
        %1143 = vmatpush1.msra.mxu0 0.0
        %1144 = vmatprep.subr.mxu0 0.0
        %1145 = vmatpush1.msra.mxu0 0.0
        %1146 = vmatprep.subr.mxu0 0.0
        %1147 = vmatpush1.msra.mxu0 0.0
        %1148 = vmatprep.subr.mxu0 0.0
        %1149 = vmatpush1.msra.mxu0 0.0
        %1150 = vmatprep.subr.mxu0 0.0
        %1151 = vmatpush1.msra.mxu0 0.0
        %1152 = vmatprep.subr.mxu0 0.0
        %1153 = vmatpush1.msra.mxu0 0.0
        %1154 = vmatprep.subr.mxu0 0.0
        %1155 = vmatpush1.msra.mxu0 0.0
        %1156 = vmatprep.subr.mxu0 0.0
        %1157 = vmatpush1.msra.mxu0 0.0
        %1158 = vmatprep.subr.mxu0 0.0
        %1159 = vmatpush1.msra.mxu0 0.0
        %1160 = vmatprep.subr.mxu0 0.0
        %1161 = vmatpush1.msra.mxu0 0.0
        %1162 = vmatprep.subr.mxu0 0.0
        %1163 = vmatpush1.msra.mxu0 0.0
        %1164 = vmatprep.subr.mxu0 0.0
        %1165 = vmatpush1.msra.mxu0 0.0
        %1166 = vmatprep.subr.mxu0 0.0
        %1167 = vmatpush1.msra.mxu0 0.0
        %1168 = vmatprep.subr.mxu0 0.0
        %1169 = vmatpush1.msra.mxu0 0.0
        %1170 = vmatprep.mubr.f32.mxu0 0.0
        %v1171 = vand.u32 %v926, 4294901760
        %v1172 = vsub.f32 %v926, %v1171
        %1173 = vmatmul.mubr.f32.gmra.mrb[0].mxu0 %v1172
        %v1174 = vpop.f32.mrb[0].mxu0
        %v1175 = vadd.f32 %v1095, %v1174
        %v1176 = vpop.f32.mrb[0].mxu0
        %1177 = vdwg.mxu0
        %1178 = vmatprep.subr.mxu0 0.0
        %v1179 = vand.u32 %v919, 4294901760
        %1180 = vmatpush1.msra.mxu0 %v1179
        %1181 = vmatprep.subr.mxu0 0.0
        %v1182 = vand.u32 %v920, 4294901760
        %1183 = vmatpush1.msra.mxu0 %v1182
        %1184 = vmatprep.subr.mxu0 0.0
        %v1185 = vand.u32 %v921, 4294901760
        %1186 = vmatpush1.msra.mxu0 %v1185
        %1187 = vmatprep.subr.mxu0 0.0
        %v1188 = vand.u32 %v922, 4294901760
        %1189 = vmatpush1.msra.mxu0 %v1188
        %1190 = vmatprep.subr.mxu0 0.0
        %1191 = vmatpush1.msra.mxu0 0.0
        %1192 = vmatprep.subr.mxu0 0.0
        %1193 = vmatpush1.msra.mxu0 0.0
        %1194 = vmatprep.subr.mxu0 0.0
        %1195 = vmatpush1.msra.mxu0 0.0
        %1196 = vmatprep.subr.mxu0 0.0
        %1197 = vmatpush1.msra.mxu0 0.0
        %1198 = vmatprep.subr.mxu0 0.0
        %1199 = vmatpush1.msra.mxu0 0.0
        %1200 = vmatprep.subr.mxu0 0.0
        %1201 = vmatpush1.msra.mxu0 0.0
        %1202 = vmatprep.subr.mxu0 0.0
        %1203 = vmatpush1.msra.mxu0 0.0
        %1204 = vmatprep.subr.mxu0 0.0
        %1205 = vmatpush1.msra.mxu0 0.0
        %1206 = vmatprep.subr.mxu0 0.0
        %1207 = vmatpush1.msra.mxu0 0.0
        %1208 = vmatprep.subr.mxu0 0.0
        %1209 = vmatpush1.msra.mxu0 0.0
        %1210 = vmatprep.subr.mxu0 0.0
        %1211 = vmatpush1.msra.mxu0 0.0
        %1212 = vmatprep.subr.mxu0 0.0
        %1213 = vmatpush1.msra.mxu0 0.0
        %1214 = vmatprep.subr.mxu0 0.0
        %1215 = vmatpush1.msra.mxu0 0.0
        %1216 = vmatprep.subr.mxu0 0.0
        %1217 = vmatpush1.msra.mxu0 0.0
        %1218 = vmatprep.subr.mxu0 0.0
        %1219 = vmatpush1.msra.mxu0 0.0
        %1220 = vmatprep.subr.mxu0 0.0
        %1221 = vmatpush1.msra.mxu0 0.0
        %1222 = vmatprep.subr.mxu0 0.0
        %1223 = vmatpush1.msra.mxu0 0.0
        %1224 = vmatprep.subr.mxu0 0.0
        %1225 = vmatpush1.msra.mxu0 0.0
        %1226 = vmatprep.subr.mxu0 0.0
        %1227 = vmatpush1.msra.mxu0 0.0
        %1228 = vmatprep.subr.mxu0 0.0
        %1229 = vmatpush1.msra.mxu0 0.0
        %1230 = vmatprep.subr.mxu0 0.0
        %1231 = vmatpush1.msra.mxu0 0.0
        %1232 = vmatprep.subr.mxu0 0.0
        %1233 = vmatpush1.msra.mxu0 0.0
        %1234 = vmatprep.subr.mxu0 0.0
        %1235 = vmatpush1.msra.mxu0 0.0
        %1236 = vmatprep.subr.mxu0 0.0
        %1237 = vmatpush1.msra.mxu0 0.0
        %1238 = vmatprep.subr.mxu0 0.0
        %1239 = vmatpush1.msra.mxu0 0.0
        %1240 = vmatprep.subr.mxu0 0.0
        %1241 = vmatpush1.msra.mxu0 0.0
        %1242 = vmatprep.subr.mxu0 0.0
        %1243 = vmatpush1.msra.mxu0 0.0
        %1244 = vmatprep.subr.mxu0 0.0
        %1245 = vmatpush1.msra.mxu0 0.0
        %1246 = vmatprep.mubr.f32.mxu0 0.0
        %v1247 = vand.u32 %v926, 4294901760
        %v1248 = vsub.f32 %v926, %v1247
        %v1249 = vand.u32 %v1248, 4294901760
        %1250 = vmatmul.mubr.f32.gmra.mrb[0].mxu0 %v1249
        %v1251 = vpop.f32.mrb[0].mxu0
        %v1252 = vadd.f32 %v1175, %v1251
        %v1253 = vpop.f32.mrb[0].mxu0
        %1254 = vdwg.mxu0
        %1255 = vmatprep.subr.mxu0 0.0
        %v1256 = vand.u32 %v919, 4294901760
        %v1257 = vsub.f32 %v919, %v1256
        %v1258 = vand.u32 %v1257, 4294901760
        %1259 = vmatpush1.msra.mxu0 %v1258
        %1260 = vmatprep.subr.mxu0 0.0
        %v1261 = vand.u32 %v920, 4294901760
        %v1262 = vsub.f32 %v920, %v1261
        %v1263 = vand.u32 %v1262, 4294901760
        %1264 = vmatpush1.msra.mxu0 %v1263
        %1265 = vmatprep.subr.mxu0 0.0
        %v1266 = vand.u32 %v921, 4294901760
        %v1267 = vsub.f32 %v921, %v1266
        %v1268 = vand.u32 %v1267, 4294901760
        %1269 = vmatpush1.msra.mxu0 %v1268
        %1270 = vmatprep.subr.mxu0 0.0
        %v1271 = vand.u32 %v922, 4294901760
        %v1272 = vsub.f32 %v922, %v1271
        %v1273 = vand.u32 %v1272, 4294901760
        %1274 = vmatpush1.msra.mxu0 %v1273
        %1275 = vmatprep.subr.mxu0 0.0
        %1276 = vmatpush1.msra.mxu0 0.0
        %1277 = vmatprep.subr.mxu0 0.0
        %1278 = vmatpush1.msra.mxu0 0.0
        %1279 = vmatprep.subr.mxu0 0.0
        %1280 = vmatpush1.msra.mxu0 0.0
        %1281 = vmatprep.subr.mxu0 0.0
        %1282 = vmatpush1.msra.mxu0 0.0
        %1283 = vmatprep.subr.mxu0 0.0
        %1284 = vmatpush1.msra.mxu0 0.0
        %1285 = vmatprep.subr.mxu0 0.0
        %1286 = vmatpush1.msra.mxu0 0.0
        %1287 = vmatprep.subr.mxu0 0.0
        %1288 = vmatpush1.msra.mxu0 0.0
        %1289 = vmatprep.subr.mxu0 0.0
        %1290 = vmatpush1.msra.mxu0 0.0
        %1291 = vmatprep.subr.mxu0 0.0
        %1292 = vmatpush1.msra.mxu0 0.0
        %1293 = vmatprep.subr.mxu0 0.0
        %1294 = vmatpush1.msra.mxu0 0.0
        %1295 = vmatprep.subr.mxu0 0.0
        %1296 = vmatpush1.msra.mxu0 0.0
        %1297 = vmatprep.subr.mxu0 0.0
        %1298 = vmatpush1.msra.mxu0 0.0
        %1299 = vmatprep.subr.mxu0 0.0
        %1300 = vmatpush1.msra.mxu0 0.0
        %1301 = vmatprep.subr.mxu0 0.0
        %1302 = vmatpush1.msra.mxu0 0.0
        %1303 = vmatprep.subr.mxu0 0.0
        %1304 = vmatpush1.msra.mxu0 0.0
        %1305 = vmatprep.subr.mxu0 0.0
        %1306 = vmatpush1.msra.mxu0 0.0
        %1307 = vmatprep.subr.mxu0 0.0
        %1308 = vmatpush1.msra.mxu0 0.0
        %1309 = vmatprep.subr.mxu0 0.0
        %1310 = vmatpush1.msra.mxu0 0.0
        %1311 = vmatprep.subr.mxu0 0.0
        %1312 = vmatpush1.msra.mxu0 0.0
        %1313 = vmatprep.subr.mxu0 0.0
        %1314 = vmatpush1.msra.mxu0 0.0
        %1315 = vmatprep.subr.mxu0 0.0
        %1316 = vmatpush1.msra.mxu0 0.0
        %1317 = vmatprep.subr.mxu0 0.0
        %1318 = vmatpush1.msra.mxu0 0.0
        %1319 = vmatprep.subr.mxu0 0.0
        %1320 = vmatpush1.msra.mxu0 0.0
        %1321 = vmatprep.subr.mxu0 0.0
        %1322 = vmatpush1.msra.mxu0 0.0
        %1323 = vmatprep.subr.mxu0 0.0
        %1324 = vmatpush1.msra.mxu0 0.0
        %1325 = vmatprep.subr.mxu0 0.0
        %1326 = vmatpush1.msra.mxu0 0.0
        %1327 = vmatprep.subr.mxu0 0.0
        %1328 = vmatpush1.msra.mxu0 0.0
        %1329 = vmatprep.subr.mxu0 0.0
        %1330 = vmatpush1.msra.mxu0 0.0
        %1331 = vmatprep.mubr.f32.mxu0 0.0
        %v1332 = vand.u32 %v926, 4294901760
        %1333 = vmatmul.mubr.f32.gmra.mrb[0].mxu0 %v1332
        %v1334 = vpop.f32.mrb[0].mxu0
        %v1335 = vadd.f32 %v1252, %v1334
        %v1336 = vpop.f32.mrb[0].mxu0
        %1337 = vdwg.mxu0
        %1338 = vmatprep.subr.mxu0 0.0
        %v1339 = vand.u32 %v919, 4294901760
        %1340 = vmatpush1.msra.mxu0 %v1339
        %1341 = vmatprep.subr.mxu0 0.0
        %v1342 = vand.u32 %v920, 4294901760
        %1343 = vmatpush1.msra.mxu0 %v1342
        %1344 = vmatprep.subr.mxu0 0.0
        %v1345 = vand.u32 %v921, 4294901760
        %1346 = vmatpush1.msra.mxu0 %v1345
        %1347 = vmatprep.subr.mxu0 0.0
        %v1348 = vand.u32 %v922, 4294901760
        %1349 = vmatpush1.msra.mxu0 %v1348
        %1350 = vmatprep.subr.mxu0 0.0
        %1351 = vmatpush1.msra.mxu0 0.0
        %1352 = vmatprep.subr.mxu0 0.0
        %1353 = vmatpush1.msra.mxu0 0.0
        %1354 = vmatprep.subr.mxu0 0.0
        %1355 = vmatpush1.msra.mxu0 0.0
        %1356 = vmatprep.subr.mxu0 0.0
        %1357 = vmatpush1.msra.mxu0 0.0
        %1358 = vmatprep.subr.mxu0 0.0
        %1359 = vmatpush1.msra.mxu0 0.0
        %1360 = vmatprep.subr.mxu0 0.0
        %1361 = vmatpush1.msra.mxu0 0.0
        %1362 = vmatprep.subr.mxu0 0.0
        %1363 = vmatpush1.msra.mxu0 0.0
        %1364 = vmatprep.subr.mxu0 0.0
        %1365 = vmatpush1.msra.mxu0 0.0
        %1366 = vmatprep.subr.mxu0 0.0
        %1367 = vmatpush1.msra.mxu0 0.0
        %1368 = vmatprep.subr.mxu0 0.0
        %1369 = vmatpush1.msra.mxu0 0.0
        %1370 = vmatprep.subr.mxu0 0.0
        %1371 = vmatpush1.msra.mxu0 0.0
        %1372 = vmatprep.subr.mxu0 0.0
        %1373 = vmatpush1.msra.mxu0 0.0
        %1374 = vmatprep.subr.mxu0 0.0
        %1375 = vmatpush1.msra.mxu0 0.0
        %1376 = vmatprep.subr.mxu0 0.0
        %1377 = vmatpush1.msra.mxu0 0.0
        %1378 = vmatprep.subr.mxu0 0.0
        %1379 = vmatpush1.msra.mxu0 0.0
        %1380 = vmatprep.subr.mxu0 0.0
        %1381 = vmatpush1.msra.mxu0 0.0
        %1382 = vmatprep.subr.mxu0 0.0
        %1383 = vmatpush1.msra.mxu0 0.0
        %1384 = vmatprep.subr.mxu0 0.0
        %1385 = vmatpush1.msra.mxu0 0.0
        %1386 = vmatprep.subr.mxu0 0.0
        %1387 = vmatpush1.msra.mxu0 0.0
        %1388 = vmatprep.subr.mxu0 0.0
        %1389 = vmatpush1.msra.mxu0 0.0
        %1390 = vmatprep.subr.mxu0 0.0
        %1391 = vmatpush1.msra.mxu0 0.0
        %1392 = vmatprep.subr.mxu0 0.0
        %1393 = vmatpush1.msra.mxu0 0.0
        %1394 = vmatprep.subr.mxu0 0.0
        %1395 = vmatpush1.msra.mxu0 0.0
        %1396 = vmatprep.subr.mxu0 0.0
        %1397 = vmatpush1.msra.mxu0 0.0
        %1398 = vmatprep.subr.mxu0 0.0
        %1399 = vmatpush1.msra.mxu0 0.0
        %1400 = vmatprep.subr.mxu0 0.0
        %1401 = vmatpush1.msra.mxu0 0.0
        %1402 = vmatprep.subr.mxu0 0.0
        %1403 = vmatpush1.msra.mxu0 0.0
        %1404 = vmatprep.subr.mxu0 0.0
        %1405 = vmatpush1.msra.mxu0 0.0
        %1406 = vmatprep.mubr.f32.mxu0 0.0
        %v1407 = vand.u32 %v926, 4294901760
        %1408 = vmatmul.mubr.f32.gmra.mrb[0].mxu0 %v1407
        %v1409 = vpop.f32.mrb[0].mxu0
        %v1410 = vadd.f32 %v1335, %v1409
        %v1411 = vpop.f32.mrb[0].mxu0
        %1412 = vdwg.mxu0
        %v1413 = vld [vmem:[%s351] sm:$0xff]
        %vm1414 = vcmp.eq.s32.totalorder %v1413, 0
        %v1415 = vsel %vm1414, -inf, %v1410
        %v1416 = vld [vmem:[#allocation2] sm:$0x1]
        %vm1417 = vcmask 7168
        %v1418 = vsel %vm1417, %v1415, -inf
        %v1419 = vrot.slane %v1418, 4
        %v1420 = vmax.f32 %v1418, %v1419
        %v1421 = vrot.slane %v1420, 2
        %v1422 = vmax.f32 %v1420, %v1421
        %v1423 = vrot.slane %v1422, 1
        %v1424 = vmax.f32 %v1422, %v1423
        %v1425 = vmax.f32 %v1416, %v1424
        %v1426 = vmax.f32 %v1425, -1e+30
        %v1427 = vsub.f32 %v1416, %v1426
        %v1428 = vmul.f32 %v1427, 1.442695
        %v1429 = vpow.pop %v1428
        %v1431 = vlaneseq
        %v1432 = vshrl.u32 %v1431, 7
        %v1433 = vsub.s32 0, %v1432
        %v1434 = vrot.slane %v1426, %v1433
        %v1436 = vsub.f32 %v1415, %v1434
        %v1437 = vmul.f32 %v1436, 1.442695
        %v1438 = vpow.pop %v1437
        %v1439 = vld [vmem:[#allocation3] sm:$0x1]
        %v1440 = vmul.f32 %v1429, %v1439
        %v1441 = vsel %vm1417, %v1438, 0.0
        %v1442 = vrot.slane %v1441, 4
        %v1443 = vadd.f32 %v1441, %v1442
        %v1444 = vrot.slane %v1443, 2
        %v1445 = vadd.f32 %v1443, %v1444
        %v1446 = vrot.slane %v1445, 1
        %v1447 = vadd.f32 %v1445, %v1446
        %v1448 = vadd.f32 %v1440, %v1447
        %vm1449 = vcmask 0
        %1450 = vst.msk [vmem:[#allocation3] sm:$0x1] %vm1449, %v1448
        %1451 = vxpose.xlu0.b32.start [1/16] %v1438, 128
        %1452 = vxpose.xlu0.b32.cont [2/16] 0.0, 128
        %1453 = vxpose.xlu0.b32.cont [3/16] 0.0, 128
        %1454 = vxpose.xlu0.b32.cont [4/16] 0.0, 128
        %1455 = vxpose.xlu0.b32.cont [5/16] 0.0, 128
        %1456 = vxpose.xlu0.b32.cont [6/16] 0.0, 128
        %1457 = vxpose.xlu0.b32.cont [7/16] 0.0, 128
        %1458 = vxpose.xlu0.b32.cont [8/16] 0.0, 128
        %1459 = vxpose.xlu0.b32.cont [9/16] 0.0, 128
        %1460 = vxpose.xlu0.b32.cont [10/16] 0.0, 128
        %1461 = vxpose.xlu0.b32.cont [11/16] 0.0, 128
        %1462 = vxpose.xlu0.b32.cont [12/16] 0.0, 128
        %1463 = vxpose.xlu0.b32.cont [13/16] 0.0, 128
        %1464 = vxpose.xlu0.b32.cont [14/16] 0.0, 128
        %1465 = vxpose.xlu0.b32.cont [15/16] 0.0, 128
        %1466 = vxpose.xlu0.b32.end [16/16] 0.0, 128
        %v1467 = vpop.trf.xlu0
        %v1468 = vpop.trf.xlu0
        %v1469 = vpop.trf.xlu0
        %v1470 = vpop.trf.xlu0
        %v1471 = vpop.trf.xlu0
        %v1472 = vpop.trf.xlu0
        %v1473 = vpop.trf.xlu0
        %v1474 = vpop.trf.xlu0
        %v1475 = vpop.trf.xlu0
        %v1476 = vpop.trf.xlu0
        %v1477 = vpop.trf.xlu0
        %v1478 = vpop.trf.xlu0
        %v1479 = vpop.trf.xlu0
        %v1480 = vpop.trf.xlu0
        %v1481 = vpop.trf.xlu0
        %v1482 = vpop.trf.xlu0
        %vm1483 = vcmask 64512
        %v1485 = vsel %vm1483, %v1467, 0
        %1487 = vmatprep.subr.mxu0 0.0
        %v1488 = vand.u32 %v361, 4294901760
        %1489 = vmatpush1.msra.mxu0 %v1488
        %1490 = vmatprep.subr.mxu0 0.0
        %1491 = vmatpush1.msra.mxu0 0.0
        %1492 = vmatprep.subr.mxu0 0.0
        %1493 = vmatpush1.msra.mxu0 0.0
        %1494 = vmatprep.subr.mxu0 0.0
        %1495 = vmatpush1.msra.mxu0 0.0
        %1496 = vmatprep.subr.mxu0 0.0
        %1497 = vmatpush1.msra.mxu0 0.0
        %1498 = vmatprep.subr.mxu0 0.0
        %1499 = vmatpush1.msra.mxu0 0.0
        %1500 = vmatprep.subr.mxu0 0.0
        %1501 = vmatpush1.msra.mxu0 0.0
        %1502 = vmatprep.subr.mxu0 0.0
        %1503 = vmatpush1.msra.mxu0 0.0
        %1504 = vmatprep.subr.mxu0 0.0
        %1505 = vmatpush1.msra.mxu0 0.0
        %1506 = vmatprep.subr.mxu0 0.0
        %1507 = vmatpush1.msra.mxu0 0.0
        %1508 = vmatprep.subr.mxu0 0.0
        %1509 = vmatpush1.msra.mxu0 0.0
        %1510 = vmatprep.subr.mxu0 0.0
        %1511 = vmatpush1.msra.mxu0 0.0
        %1512 = vmatprep.subr.mxu0 0.0
        %1513 = vmatpush1.msra.mxu0 0.0
        %1514 = vmatprep.subr.mxu0 0.0
        %1515 = vmatpush1.msra.mxu0 0.0
        %1516 = vmatprep.subr.mxu0 0.0
        %1517 = vmatpush1.msra.mxu0 0.0
        %1518 = vmatprep.subr.mxu0 0.0
        %1519 = vmatpush1.msra.mxu0 0.0
        %1520 = vmatprep.subr.mxu0 0.0
        %1521 = vmatpush1.msra.mxu0 0.0
        %1522 = vmatprep.subr.mxu0 0.0
        %1523 = vmatpush1.msra.mxu0 0.0
        %1524 = vmatprep.subr.mxu0 0.0
        %1525 = vmatpush1.msra.mxu0 0.0
        %1526 = vmatprep.subr.mxu0 0.0
        %1527 = vmatpush1.msra.mxu0 0.0
        %1528 = vmatprep.subr.mxu0 0.0
        %1529 = vmatpush1.msra.mxu0 0.0
        %1530 = vmatprep.subr.mxu0 0.0
        %1531 = vmatpush1.msra.mxu0 0.0
        %1532 = vmatprep.subr.mxu0 0.0
        %1533 = vmatpush1.msra.mxu0 0.0
        %1534 = vmatprep.subr.mxu0 0.0
        %1535 = vmatpush1.msra.mxu0 0.0
        %1536 = vmatprep.subr.mxu0 0.0
        %1537 = vmatpush1.msra.mxu0 0.0
        %1538 = vmatprep.subr.mxu0 0.0
        %1539 = vmatpush1.msra.mxu0 0.0
        %1540 = vmatprep.subr.mxu0 0.0
        %1541 = vmatpush1.msra.mxu0 0.0
        %1542 = vmatprep.subr.mxu0 0.0
        %1543 = vmatpush1.msra.mxu0 0.0
        %1544 = vmatprep.subr.mxu0 0.0
        %1545 = vmatpush1.msra.mxu0 0.0
        %1546 = vmatprep.subr.mxu0 0.0
        %1547 = vmatpush1.msra.mxu0 0.0
        %1548 = vmatprep.subr.mxu0 0.0
        %1549 = vmatpush1.msra.mxu0 0.0
        %1550 = vmatprep.subr.mxu0 0.0
        %1551 = vmatpush1.msra.mxu0 0.0
        %1552 = vmatprep.mubr.f32.mxu0 0.0
        %v1553 = vand.u32 %v1485, 4294901760
        %v1554 = vsub.f32 %v1485, %v1553
        %v1555 = vand.u32 %v1554, 4294901760
        %v1556 = vsub.f32 %v1554, %v1555
        %v1557 = vand.u32 %v1556, 4294901760
        %1558 = vmatmul.mubr.f32.gmra.mrb[0].mxu0 %v1557
        %v1559 = vpop.f32.mrb[0].mxu0
        %v1560 = vadd.f32 0.0, %v1559
        %v1561 = vpop.f32.mrb[0].mxu0
        %1562 = vdwg.mxu0
        %1563 = vmatprep.subr.mxu0 0.0
        %v1564 = vand.u32 %v361, 4294901760
        %v1565 = vsub.f32 %v361, %v1564
        %v1566 = vand.u32 %v1565, 4294901760
        %v1567 = vsub.f32 %v1565, %v1566
        %v1568 = vand.u32 %v1567, 4294901760
        %1569 = vmatpush1.msra.mxu0 %v1568
        %1570 = vmatprep.subr.mxu0 0.0
        %1571 = vmatpush1.msra.mxu0 0.0
        %1572 = vmatprep.subr.mxu0 0.0
        %1573 = vmatpush1.msra.mxu0 0.0
        %1574 = vmatprep.subr.mxu0 0.0
        %1575 = vmatpush1.msra.mxu0 0.0
        %1576 = vmatprep.subr.mxu0 0.0
        %1577 = vmatpush1.msra.mxu0 0.0
        %1578 = vmatprep.subr.mxu0 0.0
        %1579 = vmatpush1.msra.mxu0 0.0
        %1580 = vmatprep.subr.mxu0 0.0
        %1581 = vmatpush1.msra.mxu0 0.0
        %1582 = vmatprep.subr.mxu0 0.0
        %1583 = vmatpush1.msra.mxu0 0.0
        %1584 = vmatprep.subr.mxu0 0.0
        %1585 = vmatpush1.msra.mxu0 0.0
        %1586 = vmatprep.subr.mxu0 0.0
        %1587 = vmatpush1.msra.mxu0 0.0
        %1588 = vmatprep.subr.mxu0 0.0
        %1589 = vmatpush1.msra.mxu0 0.0
        %1590 = vmatprep.subr.mxu0 0.0
        %1591 = vmatpush1.msra.mxu0 0.0
        %1592 = vmatprep.subr.mxu0 0.0
        %1593 = vmatpush1.msra.mxu0 0.0
        %1594 = vmatprep.subr.mxu0 0.0
        %1595 = vmatpush1.msra.mxu0 0.0
        %1596 = vmatprep.subr.mxu0 0.0
        %1597 = vmatpush1.msra.mxu0 0.0
        %1598 = vmatprep.subr.mxu0 0.0
        %1599 = vmatpush1.msra.mxu0 0.0
        %1600 = vmatprep.subr.mxu0 0.0
        %1601 = vmatpush1.msra.mxu0 0.0
        %1602 = vmatprep.subr.mxu0 0.0
        %1603 = vmatpush1.msra.mxu0 0.0
        %1604 = vmatprep.subr.mxu0 0.0
        %1605 = vmatpush1.msra.mxu0 0.0
        %1606 = vmatprep.subr.mxu0 0.0
        %1607 = vmatpush1.msra.mxu0 0.0
        %1608 = vmatprep.subr.mxu0 0.0
        %1609 = vmatpush1.msra.mxu0 0.0
        %1610 = vmatprep.subr.mxu0 0.0
        %1611 = vmatpush1.msra.mxu0 0.0
        %1612 = vmatprep.subr.mxu0 0.0
        %1613 = vmatpush1.msra.mxu0 0.0
        %1614 = vmatprep.subr.mxu0 0.0
        %1615 = vmatpush1.msra.mxu0 0.0
        %1616 = vmatprep.subr.mxu0 0.0
        %1617 = vmatpush1.msra.mxu0 0.0
        %1618 = vmatprep.subr.mxu0 0.0
        %1619 = vmatpush1.msra.mxu0 0.0
        %1620 = vmatprep.subr.mxu0 0.0
        %1621 = vmatpush1.msra.mxu0 0.0
        %1622 = vmatprep.subr.mxu0 0.0
        %1623 = vmatpush1.msra.mxu0 0.0
        %1624 = vmatprep.subr.mxu0 0.0
        %1625 = vmatpush1.msra.mxu0 0.0
        %1626 = vmatprep.subr.mxu0 0.0
        %1627 = vmatpush1.msra.mxu0 0.0
        %1628 = vmatprep.subr.mxu0 0.0
        %1629 = vmatpush1.msra.mxu0 0.0
        %1630 = vmatprep.subr.mxu0 0.0
        %1631 = vmatpush1.msra.mxu0 0.0
        %1632 = vmatprep.mubr.f32.mxu0 0.0
        %v1633 = vand.u32 %v1485, 4294901760
        %1634 = vmatmul.mubr.f32.gmra.mrb[0].mxu0 %v1633
        %v1635 = vpop.f32.mrb[0].mxu0
        %v1636 = vadd.f32 %v1560, %v1635
        %v1637 = vpop.f32.mrb[0].mxu0
        %1638 = vdwg.mxu0
        %1639 = vmatprep.subr.mxu0 0.0
        %v1640 = vand.u32 %v361, 4294901760
        %v1641 = vsub.f32 %v361, %v1640
        %1642 = vmatpush1.msra.mxu0 %v1641
        %1643 = vmatprep.subr.mxu0 0.0
        %1644 = vmatpush1.msra.mxu0 0.0
        %1645 = vmatprep.subr.mxu0 0.0
        %1646 = vmatpush1.msra.mxu0 0.0
        %1647 = vmatprep.subr.mxu0 0.0
        %1648 = vmatpush1.msra.mxu0 0.0
        %1649 = vmatprep.subr.mxu0 0.0
        %1650 = vmatpush1.msra.mxu0 0.0
        %1651 = vmatprep.subr.mxu0 0.0
        %1652 = vmatpush1.msra.mxu0 0.0
        %1653 = vmatprep.subr.mxu0 0.0
        %1654 = vmatpush1.msra.mxu0 0.0
        %1655 = vmatprep.subr.mxu0 0.0
        %1656 = vmatpush1.msra.mxu0 0.0
        %1657 = vmatprep.subr.mxu0 0.0
        %1658 = vmatpush1.msra.mxu0 0.0
        %1659 = vmatprep.subr.mxu0 0.0
        %1660 = vmatpush1.msra.mxu0 0.0
        %1661 = vmatprep.subr.mxu0 0.0
        %1662 = vmatpush1.msra.mxu0 0.0
        %1663 = vmatprep.subr.mxu0 0.0
        %1664 = vmatpush1.msra.mxu0 0.0
        %1665 = vmatprep.subr.mxu0 0.0
        %1666 = vmatpush1.msra.mxu0 0.0
        %1667 = vmatprep.subr.mxu0 0.0
        %1668 = vmatpush1.msra.mxu0 0.0
        %1669 = vmatprep.subr.mxu0 0.0
        %1670 = vmatpush1.msra.mxu0 0.0
        %1671 = vmatprep.subr.mxu0 0.0
        %1672 = vmatpush1.msra.mxu0 0.0
        %1673 = vmatprep.subr.mxu0 0.0
        %1674 = vmatpush1.msra.mxu0 0.0
        %1675 = vmatprep.subr.mxu0 0.0
        %1676 = vmatpush1.msra.mxu0 0.0
        %1677 = vmatprep.subr.mxu0 0.0
        %1678 = vmatpush1.msra.mxu0 0.0
        %1679 = vmatprep.subr.mxu0 0.0
        %1680 = vmatpush1.msra.mxu0 0.0
        %1681 = vmatprep.subr.mxu0 0.0
        %1682 = vmatpush1.msra.mxu0 0.0
        %1683 = vmatprep.subr.mxu0 0.0
        %1684 = vmatpush1.msra.mxu0 0.0
        %1685 = vmatprep.subr.mxu0 0.0
        %1686 = vmatpush1.msra.mxu0 0.0
        %1687 = vmatprep.subr.mxu0 0.0
        %1688 = vmatpush1.msra.mxu0 0.0
        %1689 = vmatprep.subr.mxu0 0.0
        %1690 = vmatpush1.msra.mxu0 0.0
        %1691 = vmatprep.subr.mxu0 0.0
        %1692 = vmatpush1.msra.mxu0 0.0
        %1693 = vmatprep.subr.mxu0 0.0
        %1694 = vmatpush1.msra.mxu0 0.0
        %1695 = vmatprep.subr.mxu0 0.0
        %1696 = vmatpush1.msra.mxu0 0.0
        %1697 = vmatprep.subr.mxu0 0.0
        %1698 = vmatpush1.msra.mxu0 0.0
        %1699 = vmatprep.subr.mxu0 0.0
        %1700 = vmatpush1.msra.mxu0 0.0
        %1701 = vmatprep.subr.mxu0 0.0
        %1702 = vmatpush1.msra.mxu0 0.0
        %1703 = vmatprep.subr.mxu0 0.0
        %1704 = vmatpush1.msra.mxu0 0.0
        %1705 = vmatprep.mubr.f32.mxu0 0.0
        %v1706 = vand.u32 %v1485, 4294901760
        %v1707 = vsub.f32 %v1485, %v1706
        %1708 = vmatmul.mubr.f32.gmra.mrb[0].mxu0 %v1707
        %v1709 = vpop.f32.mrb[0].mxu0
        %v1710 = vadd.f32 %v1636, %v1709
        %v1711 = vpop.f32.mrb[0].mxu0
        %1712 = vdwg.mxu0
        %1713 = vmatprep.subr.mxu0 0.0
        %v1714 = vand.u32 %v361, 4294901760
        %1715 = vmatpush1.msra.mxu0 %v1714
        %1716 = vmatprep.subr.mxu0 0.0
        %1717 = vmatpush1.msra.mxu0 0.0
        %1718 = vmatprep.subr.mxu0 0.0
        %1719 = vmatpush1.msra.mxu0 0.0
        %1720 = vmatprep.subr.mxu0 0.0
        %1721 = vmatpush1.msra.mxu0 0.0
        %1722 = vmatprep.subr.mxu0 0.0
        %1723 = vmatpush1.msra.mxu0 0.0
        %1724 = vmatprep.subr.mxu0 0.0
        %1725 = vmatpush1.msra.mxu0 0.0
        %1726 = vmatprep.subr.mxu0 0.0
        %1727 = vmatpush1.msra.mxu0 0.0
        %1728 = vmatprep.subr.mxu0 0.0
        %1729 = vmatpush1.msra.mxu0 0.0
        %1730 = vmatprep.subr.mxu0 0.0
        %1731 = vmatpush1.msra.mxu0 0.0
        %1732 = vmatprep.subr.mxu0 0.0
        %1733 = vmatpush1.msra.mxu0 0.0
        %1734 = vmatprep.subr.mxu0 0.0
        %1735 = vmatpush1.msra.mxu0 0.0
        %1736 = vmatprep.subr.mxu0 0.0
        %1737 = vmatpush1.msra.mxu0 0.0
        %1738 = vmatprep.subr.mxu0 0.0
        %1739 = vmatpush1.msra.mxu0 0.0
        %1740 = vmatprep.subr.mxu0 0.0
        %1741 = vmatpush1.msra.mxu0 0.0
        %1742 = vmatprep.subr.mxu0 0.0
        %1743 = vmatpush1.msra.mxu0 0.0
        %1744 = vmatprep.subr.mxu0 0.0
        %1745 = vmatpush1.msra.mxu0 0.0
        %1746 = vmatprep.subr.mxu0 0.0
        %1747 = vmatpush1.msra.mxu0 0.0
        %1748 = vmatprep.subr.mxu0 0.0
        %1749 = vmatpush1.msra.mxu0 0.0
        %1750 = vmatprep.subr.mxu0 0.0
        %1751 = vmatpush1.msra.mxu0 0.0
        %1752 = vmatprep.subr.mxu0 0.0
        %1753 = vmatpush1.msra.mxu0 0.0
        %1754 = vmatprep.subr.mxu0 0.0
        %1755 = vmatpush1.msra.mxu0 0.0
        %1756 = vmatprep.subr.mxu0 0.0
        %1757 = vmatpush1.msra.mxu0 0.0
        %1758 = vmatprep.subr.mxu0 0.0
        %1759 = vmatpush1.msra.mxu0 0.0
        %1760 = vmatprep.subr.mxu0 0.0
        %1761 = vmatpush1.msra.mxu0 0.0
        %1762 = vmatprep.subr.mxu0 0.0
        %1763 = vmatpush1.msra.mxu0 0.0
        %1764 = vmatprep.subr.mxu0 0.0
        %1765 = vmatpush1.msra.mxu0 0.0
        %1766 = vmatprep.subr.mxu0 0.0
        %1767 = vmatpush1.msra.mxu0 0.0
        %1768 = vmatprep.subr.mxu0 0.0
        %1769 = vmatpush1.msra.mxu0 0.0
        %1770 = vmatprep.subr.mxu0 0.0
        %1771 = vmatpush1.msra.mxu0 0.0
        %1772 = vmatprep.subr.mxu0 0.0
        %1773 = vmatpush1.msra.mxu0 0.0
        %1774 = vmatprep.subr.mxu0 0.0
        %1775 = vmatpush1.msra.mxu0 0.0
        %1776 = vmatprep.subr.mxu0 0.0
        %1777 = vmatpush1.msra.mxu0 0.0
        %1778 = vmatprep.mubr.f32.mxu0 0.0
        %v1779 = vand.u32 %v1485, 4294901760
        %v1780 = vsub.f32 %v1485, %v1779
        %v1781 = vand.u32 %v1780, 4294901760
        %1782 = vmatmul.mubr.f32.gmra.mrb[0].mxu0 %v1781
        %v1783 = vpop.f32.mrb[0].mxu0
        %v1784 = vadd.f32 %v1710, %v1783
        %v1785 = vpop.f32.mrb[0].mxu0
        %1786 = vdwg.mxu0
        %1787 = vmatprep.subr.mxu0 0.0
        %v1788 = vand.u32 %v361, 4294901760
        %v1789 = vsub.f32 %v361, %v1788
        %v1790 = vand.u32 %v1789, 4294901760
        %1791 = vmatpush1.msra.mxu0 %v1790
        %1792 = vmatprep.subr.mxu0 0.0
        %1793 = vmatpush1.msra.mxu0 0.0
        %1794 = vmatprep.subr.mxu0 0.0
        %1795 = vmatpush1.msra.mxu0 0.0
        %1796 = vmatprep.subr.mxu0 0.0
        %1797 = vmatpush1.msra.mxu0 0.0
        %1798 = vmatprep.subr.mxu0 0.0
        %1799 = vmatpush1.msra.mxu0 0.0
        %1800 = vmatprep.subr.mxu0 0.0
        %1801 = vmatpush1.msra.mxu0 0.0
        %1802 = vmatprep.subr.mxu0 0.0
        %1803 = vmatpush1.msra.mxu0 0.0
        %1804 = vmatprep.subr.mxu0 0.0
        %1805 = vmatpush1.msra.mxu0 0.0
        %1806 = vmatprep.subr.mxu0 0.0
        %1807 = vmatpush1.msra.mxu0 0.0
        %1808 = vmatprep.subr.mxu0 0.0
        %1809 = vmatpush1.msra.mxu0 0.0
        %1810 = vmatprep.subr.mxu0 0.0
        %1811 = vmatpush1.msra.mxu0 0.0
        %1812 = vmatprep.subr.mxu0 0.0
        %1813 = vmatpush1.msra.mxu0 0.0
        %1814 = vmatprep.subr.mxu0 0.0
        %1815 = vmatpush1.msra.mxu0 0.0
        %1816 = vmatprep.subr.mxu0 0.0
        %1817 = vmatpush1.msra.mxu0 0.0
        %1818 = vmatprep.subr.mxu0 0.0
        %1819 = vmatpush1.msra.mxu0 0.0
        %1820 = vmatprep.subr.mxu0 0.0
        %1821 = vmatpush1.msra.mxu0 0.0
        %1822 = vmatprep.subr.mxu0 0.0
        %1823 = vmatpush1.msra.mxu0 0.0
        %1824 = vmatprep.subr.mxu0 0.0
        %1825 = vmatpush1.msra.mxu0 0.0
        %1826 = vmatprep.subr.mxu0 0.0
        %1827 = vmatpush1.msra.mxu0 0.0
        %1828 = vmatprep.subr.mxu0 0.0
        %1829 = vmatpush1.msra.mxu0 0.0
        %1830 = vmatprep.subr.mxu0 0.0
        %1831 = vmatpush1.msra.mxu0 0.0
        %1832 = vmatprep.subr.mxu0 0.0
        %1833 = vmatpush1.msra.mxu0 0.0
        %1834 = vmatprep.subr.mxu0 0.0
        %1835 = vmatpush1.msra.mxu0 0.0
        %1836 = vmatprep.subr.mxu0 0.0
        %1837 = vmatpush1.msra.mxu0 0.0
        %1838 = vmatprep.subr.mxu0 0.0
        %1839 = vmatpush1.msra.mxu0 0.0
        %1840 = vmatprep.subr.mxu0 0.0
        %1841 = vmatpush1.msra.mxu0 0.0
        %1842 = vmatprep.subr.mxu0 0.0
        %1843 = vmatpush1.msra.mxu0 0.0
        %1844 = vmatprep.subr.mxu0 0.0
        %1845 = vmatpush1.msra.mxu0 0.0
        %1846 = vmatprep.subr.mxu0 0.0
        %1847 = vmatpush1.msra.mxu0 0.0
        %1848 = vmatprep.subr.mxu0 0.0
        %1849 = vmatpush1.msra.mxu0 0.0
        %1850 = vmatprep.subr.mxu0 0.0
        %1851 = vmatpush1.msra.mxu0 0.0
        %1852 = vmatprep.subr.mxu0 0.0
        %1853 = vmatpush1.msra.mxu0 0.0
        %1854 = vmatprep.mubr.f32.mxu0 0.0
        %v1855 = vand.u32 %v1485, 4294901760
        %1856 = vmatmul.mubr.f32.gmra.mrb[0].mxu0 %v1855
        %v1857 = vpop.f32.mrb[0].mxu0
        %v1858 = vadd.f32 %v1784, %v1857
        %v1859 = vpop.f32.mrb[0].mxu0
        %1860 = vdwg.mxu0
        %1861 = vmatprep.subr.mxu0 0.0
        %v1862 = vand.u32 %v361, 4294901760
        %1863 = vmatpush1.msra.mxu0 %v1862
        %1864 = vmatprep.subr.mxu0 0.0
        %1865 = vmatpush1.msra.mxu0 0.0
        %1866 = vmatprep.subr.mxu0 0.0
        %1867 = vmatpush1.msra.mxu0 0.0
        %1868 = vmatprep.subr.mxu0 0.0
        %1869 = vmatpush1.msra.mxu0 0.0
        %1870 = vmatprep.subr.mxu0 0.0
        %1871 = vmatpush1.msra.mxu0 0.0
        %1872 = vmatprep.subr.mxu0 0.0
        %1873 = vmatpush1.msra.mxu0 0.0
        %1874 = vmatprep.subr.mxu0 0.0
        %1875 = vmatpush1.msra.mxu0 0.0
        %1876 = vmatprep.subr.mxu0 0.0
        %1877 = vmatpush1.msra.mxu0 0.0
        %1878 = vmatprep.subr.mxu0 0.0
        %1879 = vmatpush1.msra.mxu0 0.0
        %1880 = vmatprep.subr.mxu0 0.0
        %1881 = vmatpush1.msra.mxu0 0.0
        %1882 = vmatprep.subr.mxu0 0.0
        %1883 = vmatpush1.msra.mxu0 0.0
        %1884 = vmatprep.subr.mxu0 0.0
        %1885 = vmatpush1.msra.mxu0 0.0
        %1886 = vmatprep.subr.mxu0 0.0
        %1887 = vmatpush1.msra.mxu0 0.0
        %1888 = vmatprep.subr.mxu0 0.0
        %1889 = vmatpush1.msra.mxu0 0.0
        %1890 = vmatprep.subr.mxu0 0.0
        %1891 = vmatpush1.msra.mxu0 0.0
        %1892 = vmatprep.subr.mxu0 0.0
        %1893 = vmatpush1.msra.mxu0 0.0
        %1894 = vmatprep.subr.mxu0 0.0
        %1895 = vmatpush1.msra.mxu0 0.0
        %1896 = vmatprep.subr.mxu0 0.0
        %1897 = vmatpush1.msra.mxu0 0.0
        %1898 = vmatprep.subr.mxu0 0.0
        %1899 = vmatpush1.msra.mxu0 0.0
        %1900 = vmatprep.subr.mxu0 0.0
        %1901 = vmatpush1.msra.mxu0 0.0
        %1902 = vmatprep.subr.mxu0 0.0
        %1903 = vmatpush1.msra.mxu0 0.0
        %1904 = vmatprep.subr.mxu0 0.0
        %1905 = vmatpush1.msra.mxu0 0.0
        %1906 = vmatprep.subr.mxu0 0.0
        %1907 = vmatpush1.msra.mxu0 0.0
        %1908 = vmatprep.subr.mxu0 0.0
        %1909 = vmatpush1.msra.mxu0 0.0
        %1910 = vmatprep.subr.mxu0 0.0
        %1911 = vmatpush1.msra.mxu0 0.0
        %1912 = vmatprep.subr.mxu0 0.0
        %1913 = vmatpush1.msra.mxu0 0.0
        %1914 = vmatprep.subr.mxu0 0.0
        %1915 = vmatpush1.msra.mxu0 0.0
        %1916 = vmatprep.subr.mxu0 0.0
        %1917 = vmatpush1.msra.mxu0 0.0
        %1918 = vmatprep.subr.mxu0 0.0
        %1919 = vmatpush1.msra.mxu0 0.0
        %1920 = vmatprep.subr.mxu0 0.0
        %1921 = vmatpush1.msra.mxu0 0.0
        %1922 = vmatprep.subr.mxu0 0.0
        %1923 = vmatpush1.msra.mxu0 0.0
        %1924 = vmatprep.subr.mxu0 0.0
        %1925 = vmatpush1.msra.mxu0 0.0
        %1926 = vmatprep.mubr.f32.mxu0 0.0
        %v1927 = vand.u32 %v1485, 4294901760
        %1928 = vmatmul.mubr.f32.gmra.mrb[0].mxu0 %v1927
        %v1929 = vpop.f32.mrb[0].mxu0
        %v1930 = vadd.f32 %v1858, %v1929
        %v1931 = vpop.f32.mrb[0].mxu0
        %1932 = vdwg.mxu0
        %v1933 = vld [vmem:[#allocation4] sm:$0x1]
        %1935 = vset.pattern.permute.xlu0 0
        %1936 = vperm.xlu0 %1935, %v1429
        %v1937 = vpop.permute.xlu0 %1936
        %v1939 = vlaneseq
        %v1940 = vshrl.u32 %v1939, 7
        %v1941 = vsub.s32 0, %v1940
        %v1942 = vrot.slane %v1937, %v1941
        %v1943 = vmul.f32 %v1942, %v1933
        %v1944 = vadd.f32 %v1943, %v1930
        %vm1945 = vcmask 253952
        %1946 = vst.msk [vmem:[#allocation4] sm:$0x1] %vm1945, %v1944
        %1947 = vst.msk [vmem:[#allocation2] sm:$0x1] %vm1449, %v1425
        // Predicated region
        $region57: #{tpu_custom_call.1} parent=51 // pred_check
          %p1948 = pneg %p352
        $region58: #{tpu_custom_call.1} parent=51 // pred_check_branch
          %1950 = sbr.rel (%p1948) target = $region60
        $region59: #{tpu_custom_call.1} parent=51 // pred_region
          %v1951 = vld [vmem:[#allocation4] sm:$0x1]
          %v1952 = vld [vmem:[#allocation3] sm:$0x1]
          %v1953 = vrcp.pop %v1952
          %v1954 = vmul.f32 1.0, %v1953
          %1956 = vset.pattern.permute.xlu0 0
          %1957 = vperm.xlu0 %1956, %v1954
          %v1958 = vpop.permute.xlu0 %1957
          %v1960 = vlaneseq
          %v1961 = vshrl.u32 %v1960, 7
          %v1962 = vsub.s32 0, %v1961
          %v1963 = vrot.slane %v1958, %v1962
          %v1964 = vmul.f32 %v1951, %v1963
          %1965 = vst.msk [vmem:[%s337] sm:$0x1] %vm1945, %v1964
        $region60: #{tpu_custom_call.1} parent=51 // pred_fallthru
          _
        %s1966 = sand.u32 %s225, 1
        %s1967 = scalar_lea.sflag [#allocation7], %s1966
        %s1968 = sand.u32 %s225, 1
        %s1969 = scalar_lea.vmem [#allocation6], %s1968
        // Predicated region
        $region61: #{tpu_custom_call.1} parent=51 // pred_check
          %p1970 = pneg %p235
        $region62: #{tpu_custom_call.1} parent=51 // pred_check_branch
          %1972 = sbr.rel (%p1970) target = $region64
        $region63: #{tpu_custom_call.1} parent=51 // pred_region
          %s1974 = ssub.s32 16, 16
          %1975 = vsyncadd %s1967, %s1974
          %s1976 = smul.addr %s27, 16
          %s1977 = scalar_lea.hbm %s8, %s1976
          %s1979 = sshll.u32 %s1969, 4
          %s1980 = int_to_ptr.vmem [resolvable:$true] %s1979
          %1982 = dma.vmem_to_hbm [thread:$0]  %s1980, 16, %s1977, %s1967
        $region64: #{tpu_custom_call.1} parent=51 // pred_fallthru
          _
      $region52: #{tpu_custom_call.1} parent=5 // pred_fallthru
        _
      %p1983 = scmp.le.s32.totalorder 2, %s18
      // Predicated region
      $region65: #{tpu_custom_call.1} parent=5 // pred_check
        %p1984 = pneg %p1983
      $region66: #{tpu_custom_call.1} parent=5 // pred_check_branch
        %1986 = sbr.rel (%p1984) target = $region68
      $region67: #{tpu_custom_call.1} parent=5 // pred_region
        %s1987 = ssub.s32 %s18, 2
        // Predicated region
        $region69: #{tpu_custom_call.1} parent=67 // pred_check
          %p1988 = pneg %p241
        $region70: #{tpu_custom_call.1} parent=67 // pred_check_branch
          %1990 = sbr.rel (%p1988) target = $region72
        $region71: #{tpu_custom_call.1} parent=67 // pred_region
          %s1991 = sand.u32 %s226, 1
          %s1992 = scalar_lea.sflag [#allocation7], %s1991
          %s1993 = sand.u32 %s226, 1
          %s1994 = scalar_lea.vmem [#allocation6], %s1993
          %1995 = dma.done %s1992, 16
        $region72: #{tpu_custom_call.1} parent=67 // pred_fallthru
          _
      $region68: #{tpu_custom_call.1} parent=5 // pred_fallthru
        _
    $region6: #{tpu_custom_call.1} parent=1 // loop_footer
      %s22 = sadd.s32 1, %s18
    $region7: #{tpu_custom_call.1} parent=1 // loop_footer_branch
      %17 = sbr.rel target = $region3
    $region8: #{tpu_custom_call.1} parent=1 // loop_exit
      _
    %1996 = vsyncpa [#allocation7], 1
    %s1997 = scalar_lea.sflag [#allocation7], 1
    %1998 = vsyncpa %s1997, 1

</llo_original>
